<compile_context>
chip_gen: v7x
topology: tpu7x:2x2x1
jax: 0.10.0
libtpu: 0.0.40
codegen_flags: <defaults>
</compile_context>

<pallas_src>
import functools

import jax
import jax.numpy as jnp
import numpy as np
from jax.experimental import pallas as pl
from jax.experimental.pallas import tpu as pltpu


def _cdiv(a, b):
    return -(-a // b)


def _round_up(a, b):
    return _cdiv(a, b) * b


_VMEM_LIMIT = 32 * 1024 * 1024   # fits v7x's 64 MiB/TC with headroom; demo uses far less


# ---------------------------------------------------------------------------
# Pallas kernel: fused activation + K-stacked tap convolution (+ optional BN stats)
# ---------------------------------------------------------------------------
def _act_stacked_conv_kernel(x_ref, w_ref, m_ref, o_ref, *stat_refs,
                             offsets, alpha, tm, span_pad, with_stats):
    """act(x) -> stride-1 multi-tap conv as ONE MXU dot per output tile.

    x_ref : (Cin, Lin) input, fully VMEM-resident (constant index map).
    w_ref : (Cout_tot, S*Cin) bf16 block weight; column block s multiplies the span
            slice at static flat offset offsets[s] (offsets are distinct / deduped).
    m_ref : (1, tm) f32 validity mask for this tile's output columns.
    o_ref : (Cout_tot, tm) bf16 lane-dense output tile.
    stat_refs (with_stats): (Cout_tot, 1) f32 sum / sum-of-squares accumulators
            (constant index map; grid axis must stay 'arbitrary').
    """
    j = pl.program_id(0)
    start = pl.multiple_of(j * tm, 128)
    # One activation-fused span per tile covers every tap window of the tile.
    span = x_ref[:, pl.ds(start, tm + span_pad)].astype(jnp.float32)
    span = jnp.where(span >= 0, span, alpha * span)          # LeakyReLU(alpha); alpha=0 -> ReLU
    # Build each DISTINCT tap slice once (in-kernel patches, no HBM im2col), stack
    # along the contraction axis, single big-K matmul.
    stacked = jnp.concatenate([span[:, off:off + tm] for off in offsets],
                              axis=0).astype(jnp.bfloat16)    # (S*Cin, tm)
    acc = jnp.dot(w_ref[...], stacked, preferred_element_type=jnp.float32)
    out = (acc * m_ref[...]).astype(o_ref.dtype)              # zero junk / padding columns
    o_ref[...] = out

    if with_stats:
        sum_ref, ssq_ref = stat_refs

        @pl.when(j == 0)
        def _():
            sum_ref[...] = jnp.zeros_like(sum_ref)
            ssq_ref[...] = jnp.zeros_like(ssq_ref)

        h = out.astype(jnp.float32)                           # stats of exactly what is stored
        sum_ref[...] += jnp.sum(h, axis=1, keepdims=True)
        ssq_ref[...] += jnp.sum(h * h, axis=1, keepdims=True)


def act_stacked_conv(x_flat, w_big, mask, offsets, *, alpha, tm, n_tiles, span_pad,
                     with_stats=False, out_dtype=jnp.bfloat16):
    """act(x) then stride-1 stacked-tap convolution over a flat (padded) grid.

    x_flat : (Cin, Lin) with Lin >= n_tiles*tm + span_pad (fully VMEM-resident).
    w_big  : (Cout_tot, len(offsets)*Cin) block weight.
    mask   : (1, n_tiles*tm) f32 column-validity mask (also masks the stored output).
    Returns (out[, sum, sumsq]).
    """
    cin, l_in = x_flat.shape
    cout_tot, k_tot = w_big.shape
    l_out = n_tiles * tm
    assert k_tot == len(offsets) * cin
    assert l_in >= l_out + span_pad and mask.shape == (1, l_out)

    # TODO(synk): for realistic channel counts (inner/outer_nc 256-512) add grid axes over
    # phase-groups / Cout blocks with dense per-group weights and halo-tiled input spans.
    kernel = functools.partial(_act_stacked_conv_kernel, offsets=tuple(offsets),
                               alpha=alpha, tm=tm, span_pad=span_pad, with_stats=with_stats)
    out_shape = [jax.ShapeDtypeStruct((cout_tot, l_out), out_dtype)]
    out_specs = [pl.BlockSpec((cout_tot, tm), lambda j: (0, j))]
    if with_stats:
        out_shape += [jax.ShapeDtypeStruct((cout_tot, 1), jnp.float32)] * 2
        out_specs += [pl.BlockSpec((cout_tot, 1), lambda j: (0, 0))] * 2
    # BN-stat accumulators (constant out index map) require a serial reduction axis.
    semantics = ("arbitrary",) if with_stats else ("parallel",)
    return pl.pallas_call(
        kernel,
        out_shape=tuple(out_shape),
        grid=(n_tiles,),
        in_specs=[pl.BlockSpec((cin, l_in), lambda j: (0, 0)),       # resident input slab
                  pl.BlockSpec((cout_tot, k_tot), lambda j: (0, 0)),
                  pl.BlockSpec((1, tm), lambda j: (0, j))],
        out_specs=tuple(out_specs),
        compiler_params=pltpu.CompilerParams(dimension_semantics=semantics,
                                             vmem_limit_bytes=_VMEM_LIMIT),
    )(x_flat, w_big.astype(jnp.bfloat16), mask)


# ---------------------------------------------------------------------------
# UnetSkipConnectionBlock (innermost) forward
# ---------------------------------------------------------------------------
def unet_innermost_forward(x, params, *, eps=1e-5, tm_cap=1024):
    n, cin, d, hh, ww = x.shape
    w_down, w_up = params["w_down"], params["w_up"]
    inner_nc, outer_nc = w_down.shape[0], w_up.shape[1]
    do, ho, wo = d // 2, hh // 2, ww // 2
    dq, hq, wq = do + 1, ho + 1, wo + 1            # phase-stacked (padded/2) grid
    du, hu, wu = do + 2, ho + 2, wo + 2            # shared zero-padded flat layout for both convs
    l_valid = n * du * hu * wu

    # ---- tile geometry shared by both convs ---------------------------------
    n_tiles_up = _cdiv(l_valid, tm_cap)
    if l_valid >= 256:
        n_tiles_up = max(n_tiles_up, 2)            # >=2 tiles so parallel axes can span both v7x TCs
    tm = _round_up(_cdiv(l_valid, n_tiles_up), 128)
    span_pad_up = _round_up(2 * hu * wu + 2 * wu + 2, 128)
    l_up_out = n_tiles_up * tm
    l_up_in = l_up_out + span_pad_up               # length of `mid` the up conv needs

    n_tiles_dn = _cdiv(l_up_in, tm)
    l_dn_out = n_tiles_dn * tm                     # mid is produced directly at this length
    span_pad_dn = _round_up(hu * wu + wu + 1, 128)
    l_dn_in = l_dn_out + span_pad_dn

    # ---- tiny (1, L) column-validity masks over the (n, du, hu, wu) flat grid -
    def _coords(length):
        idx = jnp.arange(length, dtype=jnp.int32)
        rem = idx % (du * hu * wu)
        z = rem // (hu * wu)
        y = (rem % (hu * wu)) // wu
        xc = rem % wu
        return idx, z, y, xc

    idx, z, y, xc = _coords(l_dn_out)              # down conv: interior = valid conv voxels,
    mask_dn = ((idx < l_valid) & (z >= 1) & (z <= do) & (y >= 1) & (y <= ho)
               & (xc >= 1) & (xc <= wo)).astype(jnp.float32)[None, :]   # border/tail -> 0
    idx, z, y, xc = _coords(l_up_out)              # up conv: columns kept after the crop
    mask_up = ((idx < l_valid) & (z < do) & (y < ho)
               & (xc < wo)).astype(jnp.float32)[None, :]

    # ---- down: LeakyReLU(0.2) + Conv3d(k4,s2,p1), phase-stacked to a stride-1 2x2x2 conv
    #      whose output lands DIRECTLY in the up conv's zero-padded (du,hu,wu) layout.
    xp = jnp.pad(x, ((0, 0), (0, 0), (1, 1), (1, 1), (1, 1)))
    xp = jnp.transpose(xp, (1, 0, 2, 3, 4))                        # (Cin, N, D+2, H+2, W+2)
    xr = xp.reshape(cin, n, dq, 2, hq, 2, wq, 2)                   # (ci,n,a,pz,b,py,c,px)
    xs = jnp.transpose(xr, (3, 5, 7, 0, 1, 2, 4, 6)).reshape(8 * cin, n, dq, hq, wq)
    xs = jnp.pad(xs, ((0, 0), (0, 0), (1, 0), (1, 0), (1, 0)))     # embed at +1 in (du,hu,wu)
    xs = xs.reshape(8 * cin, n * du * hu * wu)
    xs = jnp.pad(xs, ((0, 0), (0, l_dn_in - n * du * hu * wu)))

    wr = w_down.reshape(inner_nc, cin, 2, 2, 2, 2, 2, 2)           # (co,ci,qz,pz,qy,py,qx,px)
    w2 = jnp.transpose(wr, (0, 3, 5, 7, 1, 2, 4, 6)).reshape(inner_nc, 8 * cin, 8)
    w_big_dn = jnp.transpose(w2, (0, 2, 1)).reshape(inner_nc, 8 * 8 * cin)   # tap-major K blocks
    offs_dn = tuple(qz * hu * wu + qy * wu + qx
                    for qz in (0, 1) for qy in (0, 1) for qx in (0, 1))

    (mid,) = act_stacked_conv(xs, w_big_dn, mask_dn, offs_dn, alpha=0.2,
                              tm=tm, n_tiles=n_tiles_dn, span_pad=span_pad_dn)

    # ---- up: ReLU + ConvTranspose3d(k4,s2,p1) by sub-pixel (phase) decomposition.
    #      All 8 phases share the 27 distinct tap slices via one block-sparse weight;
    #      BN sum / sum-of-squares are accumulated in the same pass (masked columns).
    wt = jnp.transpose(w_up, (1, 0, 2, 3, 4))                      # (Cout, Cin, 4, 4, 4)
    wtr = wt[:, :, ::-1, ::-1, ::-1].reshape(outer_nc, inner_nc, 2, 2, 2, 2, 2, 2)
    w_rq = jnp.transpose(wtr, (3, 5, 7, 2, 4, 6, 0, 1)).reshape(8, 8, outer_nc, inner_nc)

    dist = tuple((sz, sy, sx) for sz in (0, 1, 2) for sy in (0, 1, 2) for sx in (0, 1, 2))
    offs_up = tuple(sz * hu * wu + sy * wu + sx for (sz, sy, sx) in dist)
    phases = tuple((rz, ry, rx) for rz in (0, 1) for ry in (0, 1) for rx in (0, 1))
    zero_blk = jnp.zeros((outer_nc, inner_nc), w_up.dtype)
    rows = []
    for ri, (rz, ry, rx) in enumerate(phases):
        blks = []
        for (sz, sy, sx) in dist:
            qz, qy, qx = sz - rz, sy - ry, sx - rx
            if 0 <= qz <= 1 and 0 <= qy <= 1 and 0 <= qx <= 1:
                blks.append(w_rq[ri, (qz * 2 + qy) * 2 + qx])
            else:
                blks.append(zero_blk)
        rows.append(jnp.concatenate(blks, axis=1))
    w_big_up = jnp.concatenate(rows, axis=0)                       # (8*Cout, 27*Cin), ~30% dense

    up_flat, ssum, ssq = act_stacked_conv(mid, w_big_up, mask_up, offs_up, alpha=0.0,
                                          tm=tm, n_tiles=n_tiles_up, span_pad=span_pad_up,
                                          with_stats=True)

    # ---- BatchNorm3d (batch statistics) from the fused, phase-major accumulators
    count = n * d * hh * ww                         # 8 phases x n*do*ho*wo valid columns / channel
    sums_c = jnp.sum(ssum[:, 0].reshape(8, outer_nc), axis=0)
    ssq_c = jnp.sum(ssq[:, 0].reshape(8, outer_nc), axis=0)
    mean = sums_c / count
    var = ssq_c / count - mean * mean               # biased variance (PyTorch training mode)
    inv = jax.lax.rsqrt(var + eps)
    scale = params["gamma"] * inv
    shift = params["beta"] - mean * scale
    # TODO(synk): running_mean/running_var updates (training-mode buffer side effect) not modeled.

    # ---- BN affine + crop + 8-way phase interleave + skip concat: done once, on bf16
    #      data, as XLA layout plumbing (strided interleave is not BlockSpec-expressible).
    scale_r = jnp.tile(scale, 8)[:, None]
    shift_r = jnp.tile(shift, 8)[:, None]
    hn = up_flat[:, :l_valid].astype(jnp.float32) * scale_r + shift_r
    hn = hn.reshape(2, 2, 2, outer_nc, n, du, hu, wu)[..., :do, :ho, :wo]
    hn = jnp.transpose(hn, (4, 3, 5, 0, 6, 1, 7, 2)).reshape(n, outer_nc, d, hh, ww)
    return jnp.concatenate([x, hn], axis=1)


# ---------------------------------------------------------------------------
# Pure-JAX reference (bf16 at the same points as the kernels)
# ---------------------------------------------------------------------------
def reference_forward(x, params, eps=1e-5):
    dn = ("NCDHW", "OIDHW", "NCDHW")
    a = jnp.where(x >= 0, x, 0.2 * x).astype(jnp.bfloat16)
    wd = params["w_down"].astype(jnp.bfloat16)
    h = jax.lax.conv_general_dilated(a, wd, (2, 2, 2), [(1, 1)] * 3,
                                     dimension_numbers=dn,
                                     preferred_element_type=jnp.float32)
    h = jnp.maximum(h, 0.0).astype(jnp.bfloat16)                   # mid stored in bf16
    w_conv = jnp.transpose(jnp.flip(params["w_up"], axis=(2, 3, 4)),
                           (1, 0, 2, 3, 4)).astype(jnp.bfloat16)
    h = jax.lax.conv_general_dilated(h, w_conv, (1, 1, 1), [(2, 2)] * 3,
                                     lhs_dilation=(2, 2, 2), dimension_numbers=dn,
                                     preferred_element_type=jnp.float32)
    h = h.astype(jnp.bfloat16).astype(jnp.float32)                 # up output stored in bf16
    mean = h.mean(axis=(0, 2, 3, 4), keepdims=True)
    var = jnp.square(h - mean).mean(axis=(0, 2, 3, 4), keepdims=True)
    hn = (h - mean) * jax.lax.rsqrt(var + eps)
    hn = hn * params["gamma"].reshape(1, -1, 1, 1, 1) + params["beta"].reshape(1, -1, 1, 1, 1)
    return jnp.concatenate([x, hn], axis=1)


if __name__ == "__main__":
    key = jax.random.PRNGKey(0)
    kx, kd, ku = jax.random.split(key, 3)

    Nb, input_nc, inner_nc, outer_nc = 2, 4, 8, 4   # input_nc defaults to outer_nc
    D, H, W = 8, 16, 16

    x = jax.random.normal(kx, (Nb, input_nc, D, H, W), jnp.float32)
    params = {
        # nn.Conv3d(input_nc, inner_nc, k=4, s=2, p=1, bias=False) weight
        "w_down": 0.02 * jax.random.normal(kd, (inner_nc, input_nc, 4, 4, 4), jnp.float32),
        # nn.ConvTranspose3d(inner_nc, outer_nc, k=4, s=2, p=1, bias=False) weight
        "w_up": 0.02 * jax.random.normal(ku, (inner_nc, outer_nc, 4, 4, 4), jnp.float32),
        # nn.BatchNorm3d(outer_nc) affine params (PyTorch default init)
        "gamma": jnp.ones((outer_nc,), jnp.float32),
        "beta": jnp.zeros((outer_nc,), jnp.float32),
    }

    fwd = jax.jit(unet_innermost_forward)
    out = jax.block_until_ready(fwd(x, params))
    assert out.shape == (Nb, input_nc + outer_nc, D, H, W)

    ref = jax.block_until_ready(reference_forward(x, params))
    # bf16 MXU operands + bf16 intermediate storage -> modest tolerance
    np.testing.assert_allclose(np.asarray(out), np.asarray(ref), rtol=2e-2, atol=2e-2)

    print("KERNEL_OK")
</pallas_src>

<mosaic_0001>
module attributes {stable_mosaic.version = 11 : i64} {
  func.func @_act_stacked_conv_kernel(%arg0: i32, %arg1: memref<32x2048xf32, #tpu.memory_space<vmem>>, %arg2: memref<8x256xbf16, #tpu.memory_space<vmem>>, %arg3: memref<1x640xf32, #tpu.memory_space<vmem>>, %arg4: memref<8x640xbf16, #tpu.memory_space<vmem>>) attributes {dimension_semantics = [#tpu.dimension_semantics<parallel>], iteration_bounds = array<i64: 3>, scalar_prefetch = 0 : i64, scratch_operands = 0 : i64, tpu.core_type = #tpu.core_type<tc>, window_params = [{pipeline_mode = #tpu.pipeline_mode<synchronous>, transform_indices = @transform_0, window_bounds = array<i64: 32, 2048>}, {pipeline_mode = #tpu.pipeline_mode<synchronous>, transform_indices = @transform_1, window_bounds = array<i64: 8, 256>}, {transform_indices = @transform_2, window_bounds = array<i64: 1, 640>}, {transform_indices = @transform_3, window_bounds = array<i64: 8, 640>}]} {
    %c640_i32 = arith.constant 640 : i32
    %0 = arith.muli %arg0, %c640_i32 : i32
    %1 = tpu.assume_multiple %0, 128 : i32
    %c0 = arith.constant 0 : index
    %2 = arith.index_cast %1 : i32 to index
    %3 = vector.load %arg1[%c0, %2] : memref<32x2048xf32, #tpu.memory_space<vmem>>, vector<32x768xf32>
    %cst = arith.constant 0.000000e+00 : f32
    %4 = vector.broadcast %cst : f32 to vector<32x768xf32>
    %5 = arith.cmpf oge, %3, %4 : vector<32x768xf32>
    %cst_0 = arith.constant 2.000000e-01 : f32
    %6 = vector.broadcast %cst_0 : f32 to vector<32x768xf32>
    %7 = arith.mulf %6, %3 : vector<32x768xf32>
    %8 = arith.select %5, %3, %7 : vector<32x768xi1>, vector<32x768xf32>
    %9 = vector.extract_strided_slice %8 {offsets = [0, 0], sizes = [32, 640], strides = [1, 1]} : vector<32x768xf32> to vector<32x640xf32>
    %10 = vector.extract_strided_slice %8 {offsets = [0, 1], sizes = [32, 640], strides = [1, 1]} : vector<32x768xf32> to vector<32x640xf32>
    %11 = vector.extract_strided_slice %8 {offsets = [0, 10], sizes = [32, 640], strides = [1, 1]} : vector<32x768xf32> to vector<32x640xf32>
    %12 = vector.extract_strided_slice %8 {offsets = [0, 11], sizes = [32, 640], strides = [1, 1]} : vector<32x768xf32> to vector<32x640xf32>
    %13 = vector.extract_strided_slice %8 {offsets = [0, 100], sizes = [32, 640], strides = [1, 1]} : vector<32x768xf32> to vector<32x640xf32>
    %14 = vector.extract_strided_slice %8 {offsets = [0, 101], sizes = [32, 640], strides = [1, 1]} : vector<32x768xf32> to vector<32x640xf32>
    %15 = vector.extract_strided_slice %8 {offsets = [0, 110], sizes = [32, 640], strides = [1, 1]} : vector<32x768xf32> to vector<32x640xf32>
    %16 = vector.extract_strided_slice %8 {offsets = [0, 111], sizes = [32, 640], strides = [1, 1]} : vector<32x768xf32> to vector<32x640xf32>
    %17 = tpu.concatenate %9, %10, %11, %12, %13, %14, %15, %16 in 0 : vector<32x640xf32>, vector<32x640xf32>, vector<32x640xf32>, vector<32x640xf32>, vector<32x640xf32>, vector<32x640xf32>, vector<32x640xf32>, vector<32x640xf32> -> vector<256x640xf32>
    %18 = arith.truncf %17 : vector<256x640xf32> to vector<256x640xbf16>
    %c0_1 = arith.constant 0 : index
    %c0_2 = arith.constant 0 : index
    %19 = vector.load %arg2[%c0_1, %c0_2] : memref<8x256xbf16, #tpu.memory_space<vmem>>, vector<8x256xbf16>
    %cst_3 = arith.constant dense<0.000000e+00> : vector<8x640xf32>
    %20 = tpu.matmul %19, %18, %cst_3 {dimension_numbers = #tpu.dot_dimension_numbers<[1], [0], [0], [1], [0, 0, 1, 1], [], []>} : vector<8x256xbf16>, vector<256x640xbf16>, vector<8x640xf32> -> vector<8x640xf32>
    %c0_4 = arith.constant 0 : index
    %c0_5 = arith.constant 0 : index
    %21 = vector.load %arg3[%c0_4, %c0_5] : memref<1x640xf32, #tpu.memory_space<vmem>>, vector<1x640xf32>
    %22 = vector.broadcast %21 : vector<1x640xf32> to vector<8x640xf32>
    %23 = arith.mulf %20, %22 : vector<8x640xf32>
    %24 = arith.truncf %23 : vector<8x640xf32> to vector<8x640xbf16>
    %c0_6 = arith.constant 0 : index
    %c0_7 = arith.constant 0 : index
    %25 = vector.load %arg4[%c0_6, %c0_7] : memref<8x640xbf16, #tpu.memory_space<vmem>>, vector<8x640xbf16>
    tpu.vector_store %arg4[%c0_6, %c0_7], %24 {strides = array<i32>} : memref<8x640xbf16, #tpu.memory_space<vmem>>, vector<8x640xbf16>,
    return
  }
  func.func @transform_0(%arg0: i32) -> (i32, i32) {
    %c0_i32 = arith.constant 0 : i32
    %c0_i32_0 = arith.constant 0 : i32
    %c0_i32_1 = arith.constant 0 : i32
    return %c0_i32, %c0_i32_0 : i32, i32
  }
  func.func @transform_1(%arg0: i32) -> (i32, i32) {
    %c0_i32 = arith.constant 0 : i32
    %c0_i32_0 = arith.constant 0 : i32
    %c0_i32_1 = arith.constant 0 : i32
    return %c0_i32, %c0_i32_0 : i32, i32
  }
  func.func @transform_2(%arg0: i32) -> (i32, i32) {
    %c0_i32 = arith.constant 0 : i32
    %c0_i32_0 = arith.constant 0 : i32
    return %c0_i32, %arg0 : i32, i32
  }
  func.func @transform_3(%arg0: i32) -> (i32, i32) {
    %c0_i32 = arith.constant 0 : i32
    %c0_i32_0 = arith.constant 0 : i32
    return %c0_i32, %arg0 : i32, i32
  }
}

module attributes {stable_mosaic.version = 11 : i64} {
  func.func @_act_stacked_conv_kernel(%arg0: i32, %arg1: memref<8x1920xbf16, #tpu.memory_space<vmem>>, %arg2: memref<32x216xbf16, #tpu.memory_space<vmem>>, %arg3: memref<1x640xf32, #tpu.memory_space<vmem>>, %arg4: memref<32x640xbf16, #tpu.memory_space<vmem>>, %arg5: memref<32x1xf32, #tpu.memory_space<vmem>>, %arg6: memref<32x1xf32, #tpu.memory_space<vmem>>) attributes {dimension_semantics = [#tpu.dimension_semantics<arbitrary>], iteration_bounds = array<i64: 2>, scalar_prefetch = 0 : i64, scratch_operands = 0 : i64, tpu.core_type = #tpu.core_type<tc>, window_params = [{pipeline_mode = #tpu.pipeline_mode<synchronous>, transform_indices = @transform_0, window_bounds = array<i64: 8, 1920>}, {pipeline_mode = #tpu.pipeline_mode<synchronous>, transform_indices = @transform_1, window_bounds = array<i64: 32, 216>}, {transform_indices = @transform_2, window_bounds = array<i64: 1, 640>}, {transform_indices = @transform_3, window_bounds = array<i64: 32, 640>}, {pipeline_mode = #tpu.pipeline_mode<synchronous>, transform_indices = @transform_4, window_bounds = array<i64: 32, 1>}, {pipeline_mode = #tpu.pipeline_mode<synchronous>, transform_indices = @transform_5, window_bounds = array<i64: 32, 1>}]} {
    %c640_i32 = arith.constant 640 : i32
    %0 = arith.muli %arg0, %c640_i32 : i32
    %1 = tpu.assume_multiple %0, 128 : i32
    %c0 = arith.constant 0 : index
    %2 = arith.index_cast %1 : i32 to index
    %3 = vector.load %arg1[%c0, %2] : memref<8x1920xbf16, #tpu.memory_space<vmem>>, vector<8x896xbf16>
    %4 = arith.extf %3 : vector<8x896xbf16> to vector<8x896xf32>
    %cst = arith.constant 0.000000e+00 : f32
    %5 = vector.broadcast %cst : f32 to vector<8x896xf32>
    %6 = arith.cmpf oge, %4, %5 : vector<8x896xf32>
    %cst_0 = arith.constant 0.000000e+00 : f32
    %7 = vector.broadcast %cst_0 : f32 to vector<8x896xf32>
    %8 = arith.mulf %7, %4 : vector<8x896xf32>
    %9 = arith.select %6, %4, %8 : vector<8x896xi1>, vector<8x896xf32>
    %10 = vector.extract_strided_slice %9 {offsets = [0, 0], sizes = [8, 640], strides = [1, 1]} : vector<8x896xf32> to vector<8x640xf32>
    %11 = vector.extract_strided_slice %9 {offsets = [0, 1], sizes = [8, 640], strides = [1, 1]} : vector<8x896xf32> to vector<8x640xf32>
    %12 = vector.extract_strided_slice %9 {offsets = [0, 2], sizes = [8, 640], strides = [1, 1]} : vector<8x896xf32> to vector<8x640xf32>
    %13 = vector.extract_strided_slice %9 {offsets = [0, 10], sizes = [8, 640], strides = [1, 1]} : vector<8x896xf32> to vector<8x640xf32>
    %14 = vector.extract_strided_slice %9 {offsets = [0, 11], sizes = [8, 640], strides = [1, 1]} : vector<8x896xf32> to vector<8x640xf32>
    %15 = vector.extract_strided_slice %9 {offsets = [0, 12], sizes = [8, 640], strides = [1, 1]} : vector<8x896xf32> to vector<8x640xf32>
    %16 = vector.extract_strided_slice %9 {offsets = [0, 20], sizes = [8, 640], strides = [1, 1]} : vector<8x896xf32> to vector<8x640xf32>
    %17 = vector.extract_strided_slice %9 {offsets = [0, 21], sizes = [8, 640], strides = [1, 1]} : vector<8x896xf32> to vector<8x640xf32>
    %18 = vector.extract_strided_slice %9 {offsets = [0, 22], sizes = [8, 640], strides = [1, 1]} : vector<8x896xf32> to vector<8x640xf32>
    %19 = vector.extract_strided_slice %9 {offsets = [0, 100], sizes = [8, 640], strides = [1, 1]} : vector<8x896xf32> to vector<8x640xf32>
    %20 = vector.extract_strided_slice %9 {offsets = [0, 101], sizes = [8, 640], strides = [1, 1]} : vector<8x896xf32> to vector<8x640xf32>
    %21 = vector.extract_strided_slice %9 {offsets = [0, 102], sizes = [8, 640], strides = [1, 1]} : vector<8x896xf32> to vector<8x640xf32>
    %22 = vector.extract_strided_slice %9 {offsets = [0, 110], sizes = [8, 640], strides = [1, 1]} : vector<8x896xf32> to vector<8x640xf32>
    %23 = vector.extract_strided_slice %9 {offsets = [0, 111], sizes = [8, 640], strides = [1, 1]} : vector<8x896xf32> to vector<8x640xf32>
    %24 = vector.extract_strided_slice %9 {offsets = [0, 112], sizes = [8, 640], strides = [1, 1]} : vector<8x896xf32> to vector<8x640xf32>
    %25 = vector.extract_strided_slice %9 {offsets = [0, 120], sizes = [8, 640], strides = [1, 1]} : vector<8x896xf32> to vector<8x640xf32>
    %26 = vector.extract_strided_slice %9 {offsets = [0, 121], sizes = [8, 640], strides = [1, 1]} : vector<8x896xf32> to vector<8x640xf32>
    %27 = vector.extract_strided_slice %9 {offsets = [0, 122], sizes = [8, 640], strides = [1, 1]} : vector<8x896xf32> to vector<8x640xf32>
    %28 = vector.extract_strided_slice %9 {offsets = [0, 200], sizes = [8, 640], strides = [1, 1]} : vector<8x896xf32> to vector<8x640xf32>
    %29 = vector.extract_strided_slice %9 {offsets = [0, 201], sizes = [8, 640], strides = [1, 1]} : vector<8x896xf32> to vector<8x640xf32>
    %30 = vector.extract_strided_slice %9 {offsets = [0, 202], sizes = [8, 640], strides = [1, 1]} : vector<8x896xf32> to vector<8x640xf32>
    %31 = vector.extract_strided_slice %9 {offsets = [0, 210], sizes = [8, 640], strides = [1, 1]} : vector<8x896xf32> to vector<8x640xf32>
    %32 = vector.extract_strided_slice %9 {offsets = [0, 211], sizes = [8, 640], strides = [1, 1]} : vector<8x896xf32> to vector<8x640xf32>
    %33 = vector.extract_strided_slice %9 {offsets = [0, 212], sizes = [8, 640], strides = [1, 1]} : vector<8x896xf32> to vector<8x640xf32>
    %34 = vector.extract_strided_slice %9 {offsets = [0, 220], sizes = [8, 640], strides = [1, 1]} : vector<8x896xf32> to vector<8x640xf32>
    %35 = vector.extract_strided_slice %9 {offsets = [0, 221], sizes = [8, 640], strides = [1, 1]} : vector<8x896xf32> to vector<8x640xf32>
    %36 = vector.extract_strided_slice %9 {offsets = [0, 222], sizes = [8, 640], strides = [1, 1]} : vector<8x896xf32> to vector<8x640xf32>
    %37 = tpu.concatenate %10, %11, %12, %13, %14, %15, %16, %17, %18, %19, %20, %21, %22, %23, %24, %25 in 0 : vector<8x640xf32>, vector<8x640xf32>, vector<8x640xf32>, vector<8x640xf32>, vector<8x640xf32>, vector<8x640xf32>, vector<8x640xf32>, vector<8x640xf32>, vector<8x640xf32>, vector<8x640xf32>, vector<8x640xf32>, vector<8x640xf32>, vector<8x640xf32>, vector<8x640xf32>, vector<8x640xf32>, vector<8x640xf32> -> vector<128x640xf32>
    %38 = tpu.concatenate %26, %27, %28, %29, %30, %31, %32, %33, %34, %35, %36 in 0 : vector<8x640xf32>, vector<8x640xf32>, vector<8x640xf32>, vector<8x640xf32>, vector<8x640xf32>, vector<8x640xf32>, vector<8x640xf32>, vector<8x640xf32>, vector<8x640xf32>, vector<8x640xf32>, vector<8x640xf32> -> vector<88x640xf32>
    %39 = tpu.concatenate %37, %38 in 0 : vector<128x640xf32>, vector<88x640xf32> -> vector<216x640xf32>
    %40 = arith.truncf %39 : vector<216x640xf32> to vector<216x640xbf16>
    %c0_1 = arith.constant 0 : index
    %c0_2 = arith.constant 0 : index
    %41 = vector.load %arg2[%c0_1, %c0_2] : memref<32x216xbf16, #tpu.memory_space<vmem>>, vector<32x216xbf16>
    %cst_3 = arith.constant dense<0.000000e+00> : vector<32x640xf32>
    %42 = tpu.matmul %41, %40, %cst_3 {dimension_numbers = #tpu.dot_dimension_numbers<[1], [0], [0], [1], [0, 0, 1, 1], [], []>} : vector<32x216xbf16>, vector<216x640xbf16>, vector<32x640xf32> -> vector<32x640xf32>
    %c0_4 = arith.constant 0 : index
    %c0_5 = arith.constant 0 : index
    %43 = vector.load %arg3[%c0_4, %c0_5] : memref<1x640xf32, #tpu.memory_space<vmem>>, vector<1x640xf32>
    %44 = vector.broadcast %43 : vector<1x640xf32> to vector<32x640xf32>
    %45 = arith.mulf %42, %44 : vector<32x640xf32>
    %46 = arith.truncf %45 : vector<32x640xf32> to vector<32x640xbf16>
    %c0_6 = arith.constant 0 : index
    %c0_7 = arith.constant 0 : index
    %47 = vector.load %arg4[%c0_6, %c0_7] : memref<32x640xbf16, #tpu.memory_space<vmem>>, vector<32x640xbf16>
    tpu.vector_store %arg4[%c0_6, %c0_7], %46 {strides = array<i32>} : memref<32x640xbf16, #tpu.memory_space<vmem>>, vector<32x640xbf16>,
    %c0_i32 = arith.constant 0 : i32
    %48 = arith.cmpi eq, %arg0, %c0_i32 : i32
    %49 = arith.extui %48 : i1 to i32
    %c0_i32_8 = arith.constant 0 : i32
    %50 = arith.cmpi ne, %49, %c0_i32_8 : i32
    scf.if %50 {
      %cst_19 = arith.constant 0.000000e+00 : f32
      %63 = vector.broadcast %cst_19 : f32 to vector<32x1xf32>
      %c0_20 = arith.constant 0 : index
      %c0_21 = arith.constant 0 : index
      %64 = vector.load %arg5[%c0_20, %c0_21] : memref<32x1xf32, #tpu.memory_space<vmem>>, vector<32x1xf32>
      tpu.vector_store %arg5[%c0_20, %c0_21], %63 {strides = array<i32>} : memref<32x1xf32, #tpu.memory_space<vmem>>, vector<32x1xf32>,
      %cst_22 = arith.constant 0.000000e+00 : f32
      %65 = vector.broadcast %cst_22 : f32 to vector<32x1xf32>
      %c0_23 = arith.constant 0 : index
      %c0_24 = arith.constant 0 : index
      %66 = vector.load %arg6[%c0_23, %c0_24] : memref<32x1xf32, #tpu.memory_space<vmem>>, vector<32x1xf32>
      tpu.vector_store %arg6[%c0_23, %c0_24], %65 {strides = array<i32>} : memref<32x1xf32, #tpu.memory_space<vmem>>, vector<32x1xf32>,
    } else {
    }
    %51 = arith.extf %46 : vector<32x640xbf16> to vector<32x640xf32>
    %c0_9 = arith.constant 0 : index
    %c0_10 = arith.constant 0 : index
    %52 = vector.load %arg5[%c0_9, %c0_10] : memref<32x1xf32, #tpu.memory_space<vmem>>, vector<32x1xf32>
    %cst_11 = arith.constant dense<0.000000e+00> : vector<32xf32>
    %53 = vector.multi_reduction <add>, %51, %cst_11 [1] : vector<32x640xf32> to vector<32xf32>
    %54 = vector.shape_cast %53 : vector<32xf32> to vector<32x1xf32>
    %55 = arith.addf %52, %54 : vector<32x1xf32>
    %c0_12 = arith.constant 0 : index
    %c0_13 = arith.constant 0 : index
    %56 = vector.load %arg5[%c0_12, %c0_13] : memref<32x1xf32, #tpu.memory_space<vmem>>, vector<32x1xf32>
    tpu.vector_store %arg5[%c0_12, %c0_13], %55 {strides = array<i32>} : memref<32x1xf32, #tpu.memory_space<vmem>>, vector<32x1xf32>,
    %c0_14 = arith.constant 0 : index
    %c0_15 = arith.constant 0 : index
    %57 = vector.load %arg6[%c0_14, %c0_15] : memref<32x1xf32, #tpu.memory_space<vmem>>, vector<32x1xf32>
    %58 = arith.mulf %51, %51 : vector<32x640xf32>
    %cst_16 = arith.constant dense<0.000000e+00> : vector<32xf32>
    %59 = vector.multi_reduction <add>, %58, %cst_16 [1] : vector<32x640xf32> to vector<32xf32>
    %60 = vector.shape_cast %59 : vector<32xf32> to vector<32x1xf32>
    %61 = arith.addf %57, %60 : vector<32x1xf32>
    %c0_17 = arith.constant 0 : index
    %c0_18 = arith.constant 0 : index
    %62 = vector.load %arg6[%c0_17, %c0_18] : memref<32x1xf32, #tpu.memory_space<vmem>>, vector<32x1xf32>
    tpu.vector_store %arg6[%c0_17, %c0_18], %61 {strides = array<i32>} : memref<32x1xf32, #tpu.memory_space<vmem>>, vector<32x1xf32>,
    return
  }
  func.func @transform_0(%arg0: i32) -> (i32, i32) {
    %c0_i32 = arith.constant 0 : i32
    %c0_i32_0 = arith.constant 0 : i32
    %c0_i32_1 = arith.constant 0 : i32
    return %c0_i32, %c0_i32_0 : i32, i32
  }
  func.func @transform_1(%arg0: i32) -> (i32, i32) {
    %c0_i32 = arith.constant 0 : i32
    %c0_i32_0 = arith.constant 0 : i32
    %c0_i32_1 = arith.constant 0 : i32
    return %c0_i32, %c0_i32_0 : i32, i32
  }
  func.func @transform_2(%arg0: i32) -> (i32, i32) {
    %c0_i32 = arith.constant 0 : i32
    %c0_i32_0 = arith.constant 0 : i32
    return %c0_i32, %arg0 : i32, i32
  }
  func.func @transform_3(%arg0: i32) -> (i32, i32) {
    %c0_i32 = arith.constant 0 : i32
    %c0_i32_0 = arith.constant 0 : i32
    return %c0_i32, %arg0 : i32, i32
  }
  func.func @transform_4(%arg0: i32) -> (i32, i32) {
    %c0_i32 = arith.constant 0 : i32
    %c0_i32_0 = arith.constant 0 : i32
    %c0_i32_1 = arith.constant 0 : i32
    return %c0_i32, %c0_i32_0 : i32, i32
  }
  func.func @transform_5(%arg0: i32) -> (i32, i32) {
    %c0_i32 = arith.constant 0 : i32
    %c0_i32_0 = arith.constant 0 : i32
    %c0_i32_1 = arith.constant 0 : i32
    return %c0_i32, %c0_i32_0 : i32, i32
  }
}

</mosaic_0001>

<llo_original>
// kernel: squeeze.130
$region0: #{squeeze.130}
  %s0 = inlined_call_operand.vmem [shape: f32[32], index: 0, kind: input, shape index: {}]
  %s1 = inlined_call_operand.vmem [shape: f32[8,4], index: 1, kind: output, shape index: {}]
  $region1: #{squeeze.130} parent=0
    #allocation0 [shape = 'u8[4096]{0}', space=vmem, size = 0x1000, scoped, tag = 'scoped mem for input reshape']
    %s3 = sshllo.u32 0, 1
    %v4 = vld [vmem:[%s0] sm:%s3]
    %5 = vst [vmem:[#allocation0] sm:%s3] %v4
    %v6 = vld [vmem:[#allocation0] sm:$0x1]
    %vm7 = vcmask 31744
    %8 = vst.msk [vmem:[%s1] sm:$0x1] %vm7, %v6
    %v9 = vld [vmem:[#allocation0] sm:$0x1]
    %10 = vrot.lane.b32.xlu0 %v9, 124
    %v11 = vpop.permute.xlu0 %10
    %vm12 = vcmask 31744
    %s13 = scalar_lea.vmem %s1, 1
    %14 = vst.msk [vmem:[%s13] sm:$0x1] %vm12, %v11
    %v15 = vld [vmem:[#allocation0] sm:$0x1]
    %16 = vrot.lane.b32.xlu0 %v15, 120
    %v17 = vpop.permute.xlu0 %16
    %vm18 = vcmask 31744
    %s19 = scalar_lea.vmem %s1, 2
    %20 = vst.msk [vmem:[%s19] sm:$0x1] %vm18, %v17
    %v21 = vld [vmem:[#allocation0] sm:$0x1]
    %22 = vrot.lane.b32.xlu0 %v21, 116
    %v23 = vpop.permute.xlu0 %22
    %vm24 = vcmask 31744
    %s25 = scalar_lea.vmem %s1, 3
    %26 = vst.msk [vmem:[%s25] sm:$0x1] %vm24, %v23
    %v27 = vld [vmem:[#allocation0] sm:$0x1]
    %28 = vrot.lane.b32.xlu0 %v27, 112
    %v29 = vpop.permute.xlu0 %28
    %vm30 = vcmask 31744
    %s31 = scalar_lea.vmem %s1, 4
    %32 = vst.msk [vmem:[%s31] sm:$0x1] %vm30, %v29
    %v33 = vld [vmem:[#allocation0] sm:$0x1]
    %34 = vrot.lane.b32.xlu0 %v33, 108
    %v35 = vpop.permute.xlu0 %34
    %vm36 = vcmask 31744
    %s37 = scalar_lea.vmem %s1, 5
    %38 = vst.msk [vmem:[%s37] sm:$0x1] %vm36, %v35
    %v39 = vld [vmem:[#allocation0] sm:$0x1]
    %40 = vrot.lane.b32.xlu0 %v39, 104
    %v41 = vpop.permute.xlu0 %40
    %vm42 = vcmask 31744
    %s43 = scalar_lea.vmem %s1, 6
    %44 = vst.msk [vmem:[%s43] sm:$0x1] %vm42, %v41
    %v45 = vld [vmem:[#allocation0] sm:$0x1]
    %46 = vrot.lane.b32.xlu0 %v45, 100
    %v47 = vpop.permute.xlu0 %46
    %vm48 = vcmask 31744
    %s49 = scalar_lea.vmem %s1, 7
    %50 = vst.msk [vmem:[%s49] sm:$0x1] %vm48, %v47

// kernel: tile.18
$region0: #{tile.18}
  #allocation0 [shape = 's32[1]{0}', space=sflag, size = 0x4, scoped, tag = 'scoped memory for tile.18']
  %s0 = inlined_call_operand.vmem [shape: f32[4], index: 0, kind: input, shape index: {}]
  %s1 = inlined_call_operand.vmem [shape: f32[8,4], index: 1, kind: output, shape index: {}]
  // Predicated region
  $region2: #{tile.18} parent=0 // pred_check
    _
  $region3: #{tile.18} parent=0 // pred_check_branch
    %3 = sbr.rel (0) target = $region5
  $region4: #{tile.18} parent=0 // pred_region
    _
  $region5: #{tile.18} parent=0 // pred_fallthru
    _
  %v4 = vld [vmem:[%s0] ss:$0 sm:$0xff]
  %5 = vst [vmem:[%s1] sm:$0xff] %v4

// kernel: unet_innermost_forward.2
$region0: #{unet_innermost_forward.2}
  #allocation0 [shape = 'u32[]', space=smem, size = 0x4, offset = 0x4, fixed_abs, tag = 'smem constant byte address 0x4 - core index']
  #allocation1 [shape = 'u32[144,128]{1,0:T(1,128)}', space=vmem, size = 0x12000, scoped, tag = 'internal scratch']
  %s0 = inlined_call_operand.vmem [shape: f32[32,2048], index: 0, kind: input, shape index: {}]
  %s1 = inlined_call_operand.vmem [shape: bf16[8,256], index: 1, kind: input, shape index: {}]
  %s2 = inlined_call_operand.vmem [shape: f32[1,1920], index: 2, kind: input, shape index: {}]
  %s3 = inlined_call_operand.vmem [shape: bf16[8,1920], index: 3, kind: output, shape index: {}]
  %s4 = sld [smem:[#allocation0]]
  $region45: #{unet_innermost_forward.2} parent=0
    _
  %s6 = ssub.s32 1, %s4
  %s7 = scalar_select 0, %s6, %s4
  loop: start=0, step=1, limit=5
  $region2: #{unet_innermost_forward.2} parent=0 // loop_pre_header
    _
  $region3: #{unet_innermost_forward.2} parent=0 // loop_header
    %s9 = sphi 0, %s13
    %p10 = scmp.ge.s32.totalorder %s9, 5
    %s17 = sphi 0, %s17
    %s19 = sphi 0, %s17
    %s20 = sphi 0, %s19
    %s34 = sphi 0, %s20
    %s38 = sphi 0, %s38
    %s40 = sphi 0, %s38
    %s41 = sphi 0, %s40
    %s55 = sphi 0, %s41
    %s61 = sphi 0, %s63
    %s64 = sphi 0, %s61
    %s65 = sphi 0, %s64
    %s81 = sphi 0, %s65
    %s87 = sphi 0, %s89
    %s90 = sphi 0, %s87
    %s91 = sphi 0, %s90
    %s107 = sphi 0, %s91
  $region4: #{unet_innermost_forward.2} parent=0 // loop_header_branch
    %12 = sbr.rel (%p10) target = $region8
  $region5: #{unet_innermost_forward.2} parent=0 // loop_body
    %s14 = ssub.s32 %s9, 1
    %s15 = ssub.s32 %s9, 2
    %s16 = sadd.s32 %s9, 1
    %s18 = sadd.s32 %s17, 1
    %p21 = scmp.eq.s32.totalorder %s9, 2
    %p22 = scmp.ne.s32.totalorder %s17, %s19
    %p23 = scmp.eq.s32.totalorder %s9, 0
    %p24 = por %p22, %p23
    %p25 = scmp.ne.s32.totalorder %s17, %s19
    %p26 = scmp.eq.s32.totalorder %s14, 2
    %p27 = por %p25, %p26
    %p28 = scmp.ne.s32.totalorder %s19, %s20
    %p29 = scmp.eq.s32.totalorder %s14, 0
    %p30 = por %p28, %p29
    %p31 = scmp.ne.s32.totalorder %s19, %s20
    %p32 = scmp.eq.s32.totalorder %s15, 2
    %p33 = por %p31, %p32
    %p35 = scmp.ne.s32.totalorder %s20, %s34
    %p36 = scmp.eq.s32.totalorder %s15, 0
    %p37 = por %p35, %p36
    %s39 = sadd.s32 %s38, 1
    %p42 = scmp.eq.s32.totalorder %s9, 2
    %p43 = scmp.ne.s32.totalorder %s38, %s40
    %p44 = scmp.eq.s32.totalorder %s9, 0
    %p45 = por %p43, %p44
    %p46 = scmp.ne.s32.totalorder %s38, %s40
    %p47 = scmp.eq.s32.totalorder %s14, 2
    %p48 = por %p46, %p47
    %p49 = scmp.ne.s32.totalorder %s40, %s41
    %p50 = scmp.eq.s32.totalorder %s14, 0
    %p51 = por %p49, %p50
    %p52 = scmp.ne.s32.totalorder %s40, %s41
    %p53 = scmp.eq.s32.totalorder %s15, 2
    %p54 = por %p52, %p53
    %p56 = scmp.ne.s32.totalorder %s41, %s55
    %p57 = scmp.eq.s32.totalorder %s15, 0
    %p58 = por %p56, %p57
    %s59 = ssub.s32 %s9, %s16
    %p60 = scmp.eq.s32.totalorder %s59, 0
    %s62 = sadd.s32 %s61, 1
    %s63 = scalar_select %p60, %s61, %s62
    %p66 = pneg %p60
    %p67 = scmp.eq.s32.totalorder %s9, 2
    %p68 = por %p66, %p67
    %p69 = scmp.ne.s32.totalorder %s61, %s64
    %p70 = scmp.eq.s32.totalorder %s9, 0
    %p71 = por %p69, %p70
    %p72 = scmp.ne.s32.totalorder %s61, %s64
    %p73 = scmp.eq.s32.totalorder %s14, 2
    %p74 = por %p72, %p73
    %p75 = scmp.ne.s32.totalorder %s64, %s65
    %p76 = scmp.eq.s32.totalorder %s14, 0
    %p77 = por %p75, %p76
    %p78 = scmp.ne.s32.totalorder %s64, %s65
    %p79 = scmp.eq.s32.totalorder %s15, 2
    %p80 = por %p78, %p79
    %p82 = scmp.ne.s32.totalorder %s65, %s81
    %p83 = scmp.eq.s32.totalorder %s15, 0
    %p84 = por %p82, %p83
    %s85 = ssub.s32 %s9, %s16
    %p86 = scmp.eq.s32.totalorder %s85, 0
    %s88 = sadd.s32 %s87, 1
    %s89 = scalar_select %p86, %s87, %s88
    %p92 = pneg %p86
    %p93 = scmp.eq.s32.totalorder %s9, 2
    %p94 = por %p92, %p93
    %p95 = scmp.ne.s32.totalorder %s87, %s90
    %p96 = scmp.eq.s32.totalorder %s9, 0
    %p97 = por %p95, %p96
    %p98 = scmp.ne.s32.totalorder %s87, %s90
    %p99 = scmp.eq.s32.totalorder %s14, 2
    %p100 = por %p98, %p99
    %p101 = scmp.ne.s32.totalorder %s90, %s91
    %p102 = scmp.eq.s32.totalorder %s14, 0
    %p103 = por %p101, %p102
    %p104 = scmp.ne.s32.totalorder %s90, %s91
    %p105 = scmp.eq.s32.totalorder %s15, 2
    %p106 = por %p104, %p105
    %p108 = scmp.ne.s32.totalorder %s91, %s107
    %p109 = scmp.eq.s32.totalorder %s15, 0
    %p110 = por %p108, %p109
    %p111 = scmp.le.s32.totalorder 1, %s9
    %p112 = scmp.lt.s32.totalorder %s9, 4
    %p113 = pnand %p111, %p112
    %p114 = pneg %p113
    // Predicated region
    $region9: #{unet_innermost_forward.2} parent=5 // pred_check
      _
    $region10: #{unet_innermost_forward.2} parent=5 // pred_check_branch
      %116 = sbr.rel (%p113) target = $region12
    $region11: #{unet_innermost_forward.2} parent=5 // pred_region
      %s117 = ssub.s32 %s9, 1
      // Predicated region
      $region13: #{unet_innermost_forward.2} parent=11 // pred_check
        %p118 = pneg %p30
      $region14: #{unet_innermost_forward.2} parent=11 // pred_check_branch
        %120 = sbr.rel (%p118) target = $region16
      $region15: #{unet_innermost_forward.2} parent=11 // pred_region
        _
      $region16: #{unet_innermost_forward.2} parent=11 // pred_fallthru
        _
      // Predicated region
      $region17: #{unet_innermost_forward.2} parent=11 // pred_check
        %p121 = pneg %p51
      $region18: #{unet_innermost_forward.2} parent=11 // pred_check_branch
        %123 = sbr.rel (%p121) target = $region20
      $region19: #{unet_innermost_forward.2} parent=11 // pred_region
        _
      $region20: #{unet_innermost_forward.2} parent=11 // pred_fallthru
        _
    $region12: #{unet_innermost_forward.2} parent=5 // pred_fallthru
      _
    %p124 = scmp.lt.s32.totalorder %s9, 3
    // Predicated region
    $region21: #{unet_innermost_forward.2} parent=5 // pred_check
      %p125 = pneg %p124
    $region22: #{unet_innermost_forward.2} parent=5 // pred_check_branch
      %127 = sbr.rel (%p125) target = $region24
    $region23: #{unet_innermost_forward.2} parent=5 // pred_region
      // Predicated region
      $region25: #{unet_innermost_forward.2} parent=23 // pred_check
        %p128 = pneg %p71
      $region26: #{unet_innermost_forward.2} parent=23 // pred_check_branch
        %130 = sbr.rel (%p128) target = $region28
      $region27: #{unet_innermost_forward.2} parent=23 // pred_region
        %s131 = smul.u32 5, %s9
        %p132 = scmp.lt.s32.totalorder %s131, 14
        %s133 = scalar_select %p132, %s131, 14
        %s134 = scalar_lea.vmem %s2, %s133
        %s135 = smul.u32 5, %s9
      $region28: #{unet_innermost_forward.2} parent=23 // pred_fallthru
        _
    $region24: #{unet_innermost_forward.2} parent=5 // pred_fallthru
      _
    %p136 = scmp.le.s32.totalorder 1, %s9
    %p137 = scmp.lt.s32.totalorder %s9, 4
    %p138 = pnand %p136, %p137
    %p139 = pneg %p138
    // Predicated region
    $region29: #{unet_innermost_forward.2} parent=5 // pred_check
      _
    $region30: #{unet_innermost_forward.2} parent=5 // pred_check_branch
      %141 = sbr.rel (%p138) target = $region32
    $region31: #{unet_innermost_forward.2} parent=5 // pred_region
      %s142 = ssub.s32 %s9, 1
      %p143 = pneg %p30
      %p144 = pneg %p27
      %p145 = pneg %p51
      %p146 = pneg %p48
      %s147 = smul.u32 5, %s14
      %p148 = scmp.lt.s32.totalorder %s147, 14
      %s149 = scalar_select %p148, %s147, 14
      %s150 = scalar_lea.vmem %s2, %s149
      %p151 = pneg %p77
      %p152 = pneg %p74
      %p153 = pneg %p103
      %p154 = pneg %p100
      %s155 = smul.u32 5, %s14
      %p156 = scmp.lt.s32.totalorder %s155, 14
      %s157 = scalar_select %p156, %s155, 14
      %s158 = smul.addr %s157, 4
      %s159 = scalar_lea.vmem %s3, %s158
      %s160 = smul.u32 5, %s14
      %p161 = scmp.lt.s32.totalorder %s160, 14
      %s162 = scalar_select %p161, %s160, 14
      %s163 = scalar_lea.vmem %s2, %s162
      %s164 = smul.u32 5, %s14
      %s165 = smul.u32 5, %s14
      %p166 = scmp.lt.s32.totalorder %s165, 14
      %s167 = scalar_select %p166, %s165, 14
      %s168 = smul.addr %s167, 4
      %s169 = scalar_lea.vmem %s3, %s168
      %s170 = smul.u32 5, %s14
      %s172 = smul.u32 %s14, 640
      %s173 = sshra.s32 %s172, 7
      %s174 = sand.u32 %s172, 127
      %s175 = smul.addr %s173, 8
      %s176 = scalar_lea.vmem %s0, %s175
      %v177 = vld [vmem:[%s176] sm:$0xff]
      %v178 = vld [vmem:[%s176 + $0x8] sm:$0xff]
      %v179 = vld [vmem:[%s176 + $0x10] sm:$0xff]
      %v180 = vld [vmem:[%s176 + $0x18] sm:$0xff]
      %v181 = vld [vmem:[%s176 + $0x20] sm:$0xff]
      %v182 = vld [vmem:[%s176 + $0x28] sm:$0xff]
      %v183 = vld [vmem:[%s176 + $0x80] sm:$0xff]
      %v184 = vld [vmem:[%s176 + $0x88] sm:$0xff]
      %v185 = vld [vmem:[%s176 + $0x90] sm:$0xff]
      %v186 = vld [vmem:[%s176 + $0x98] sm:$0xff]
      %v187 = vld [vmem:[%s176 + $0xa0] sm:$0xff]
      %v188 = vld [vmem:[%s176 + $0xa8] sm:$0xff]
      %v189 = vld [vmem:[%s176 + $0x100] sm:$0xff]
      %v190 = vld [vmem:[%s176 + $0x108] sm:$0xff]
      %v191 = vld [vmem:[%s176 + $0x110] sm:$0xff]
      %v192 = vld [vmem:[%s176 + $0x118] sm:$0xff]
      %v193 = vld [vmem:[%s176 + $0x120] sm:$0xff]
      %v194 = vld [vmem:[%s176 + $0x128] sm:$0xff]
      %v195 = vld [vmem:[%s176 + $0x180] sm:$0xff]
      %v196 = vld [vmem:[%s176 + $0x188] sm:$0xff]
      %v197 = vld [vmem:[%s176 + $0x190] sm:$0xff]
      %v198 = vld [vmem:[%s176 + $0x198] sm:$0xff]
      %v199 = vld [vmem:[%s176 + $0x1a0] sm:$0xff]
      %v200 = vld [vmem:[%s176 + $0x1a8] sm:$0xff]
      %vm201 = vcmp.ge.f32.partialorder %v177, 0.0
      %vm202 = vcmp.ge.f32.partialorder %v178, 0.0
      %vm203 = vcmp.ge.f32.partialorder %v179, 0.0
      %vm204 = vcmp.ge.f32.partialorder %v180, 0.0
      %vm205 = vcmp.ge.f32.partialorder %v181, 0.0
      %vm206 = vcmp.ge.f32.partialorder %v182, 0.0
      %vm207 = vcmp.ge.f32.partialorder %v183, 0.0
      %vm208 = vcmp.ge.f32.partialorder %v184, 0.0
      %vm209 = vcmp.ge.f32.partialorder %v185, 0.0
      %vm210 = vcmp.ge.f32.partialorder %v186, 0.0
      %vm211 = vcmp.ge.f32.partialorder %v187, 0.0
      %vm212 = vcmp.ge.f32.partialorder %v188, 0.0
      %vm213 = vcmp.ge.f32.partialorder %v189, 0.0
      %vm214 = vcmp.ge.f32.partialorder %v190, 0.0
      %vm215 = vcmp.ge.f32.partialorder %v191, 0.0
      %vm216 = vcmp.ge.f32.partialorder %v192, 0.0
      %vm217 = vcmp.ge.f32.partialorder %v193, 0.0
      %vm218 = vcmp.ge.f32.partialorder %v194, 0.0
      %vm219 = vcmp.ge.f32.partialorder %v195, 0.0
      %vm220 = vcmp.ge.f32.partialorder %v196, 0.0
      %vm221 = vcmp.ge.f32.partialorder %v197, 0.0
      %vm222 = vcmp.ge.f32.partialorder %v198, 0.0
      %vm223 = vcmp.ge.f32.partialorder %v199, 0.0
      %vm224 = vcmp.ge.f32.partialorder %v200, 0.0
      %v225 = vmul.f32 %v177, 0.2
      %v226 = vmul.f32 %v178, 0.2
      %v227 = vmul.f32 %v179, 0.2
      %v228 = vmul.f32 %v180, 0.2
      %v229 = vmul.f32 %v181, 0.2
      %v230 = vmul.f32 %v182, 0.2
      %v231 = vmul.f32 %v183, 0.2
      %v232 = vmul.f32 %v184, 0.2
      %v233 = vmul.f32 %v185, 0.2
      %v234 = vmul.f32 %v186, 0.2
      %v235 = vmul.f32 %v187, 0.2
      %v236 = vmul.f32 %v188, 0.2
      %v237 = vmul.f32 %v189, 0.2
      %v238 = vmul.f32 %v190, 0.2
      %v239 = vmul.f32 %v191, 0.2
      %v240 = vmul.f32 %v192, 0.2
      %v241 = vmul.f32 %v193, 0.2
      %v242 = vmul.f32 %v194, 0.2
      %v243 = vmul.f32 %v195, 0.2
      %v244 = vmul.f32 %v196, 0.2
      %v245 = vmul.f32 %v197, 0.2
      %v246 = vmul.f32 %v198, 0.2
      %v247 = vmul.f32 %v199, 0.2
      %v248 = vmul.f32 %v200, 0.2
      %v249 = vsel %vm201, %v177, %v225
      %v250 = vsel %vm202, %v178, %v226
      %v251 = vsel %vm203, %v179, %v227
      %v252 = vsel %vm204, %v180, %v228
      %v253 = vsel %vm205, %v181, %v229
      %v254 = vsel %vm206, %v182, %v230
      %v255 = vsel %vm207, %v183, %v231
      %v256 = vsel %vm208, %v184, %v232
      %v257 = vsel %vm209, %v185, %v233
      %v258 = vsel %vm210, %v186, %v234
      %v259 = vsel %vm211, %v187, %v235
      %v260 = vsel %vm212, %v188, %v236
      %v261 = vsel %vm213, %v189, %v237
      %v262 = vsel %vm214, %v190, %v238
      %v263 = vsel %vm215, %v191, %v239
      %v264 = vsel %vm216, %v192, %v240
      %v265 = vsel %vm217, %v193, %v241
      %v266 = vsel %vm218, %v194, %v242
      %v267 = vsel %vm219, %v195, %v243
      %v268 = vsel %vm220, %v196, %v244
      %v269 = vsel %vm221, %v197, %v245
      %v270 = vsel %vm222, %v198, %v246
      %v271 = vsel %vm223, %v199, %v247
      %v272 = vsel %vm224, %v200, %v248
      %297 = vrot.lane.b32.xlu0 %v249, 127
      %v298 = vpop.permute.xlu0 %297
      %299 = vrot.lane.b32.xlu0 %v250, 127
      %v300 = vpop.permute.xlu0 %299
      %301 = vrot.lane.b32.xlu0 %v251, 127
      %v302 = vpop.permute.xlu0 %301
      %303 = vrot.lane.b32.xlu0 %v252, 127
      %v304 = vpop.permute.xlu0 %303
      %305 = vrot.lane.b32.xlu0 %v253, 127
      %v306 = vpop.permute.xlu0 %305
      %307 = vrot.lane.b32.xlu0 %v254, 127
      %v308 = vpop.permute.xlu0 %307
      %309 = vrot.lane.b32.xlu0 %v255, 127
      %v310 = vpop.permute.xlu0 %309
      %311 = vrot.lane.b32.xlu0 %v256, 127
      %v312 = vpop.permute.xlu0 %311
      %313 = vrot.lane.b32.xlu0 %v257, 127
      %v314 = vpop.permute.xlu0 %313
      %315 = vrot.lane.b32.xlu0 %v258, 127
      %v316 = vpop.permute.xlu0 %315
      %317 = vrot.lane.b32.xlu0 %v259, 127
      %v318 = vpop.permute.xlu0 %317
      %319 = vrot.lane.b32.xlu0 %v260, 127
      %v320 = vpop.permute.xlu0 %319
      %321 = vrot.lane.b32.xlu0 %v261, 127
      %v322 = vpop.permute.xlu0 %321
      %323 = vrot.lane.b32.xlu0 %v262, 127
      %v324 = vpop.permute.xlu0 %323
      %325 = vrot.lane.b32.xlu0 %v263, 127
      %v326 = vpop.permute.xlu0 %325
      %327 = vrot.lane.b32.xlu0 %v264, 127
      %v328 = vpop.permute.xlu0 %327
      %329 = vrot.lane.b32.xlu0 %v265, 127
      %v330 = vpop.permute.xlu0 %329
      %331 = vrot.lane.b32.xlu0 %v266, 127
      %v332 = vpop.permute.xlu0 %331
      %333 = vrot.lane.b32.xlu0 %v267, 127
      %v334 = vpop.permute.xlu0 %333
      %335 = vrot.lane.b32.xlu0 %v268, 127
      %v336 = vpop.permute.xlu0 %335
      %337 = vrot.lane.b32.xlu0 %v269, 127
      %v338 = vpop.permute.xlu0 %337
      %339 = vrot.lane.b32.xlu0 %v270, 127
      %v340 = vpop.permute.xlu0 %339
      %341 = vrot.lane.b32.xlu0 %v271, 127
      %v342 = vpop.permute.xlu0 %341
      %343 = vrot.lane.b32.xlu0 %v272, 127
      %v344 = vpop.permute.xlu0 %343
      %vm345 = vcmask 1039360
      %v346 = vsel %vm345, %v298, %v300
      %v347 = vsel %vm345, %v300, %v302
      %v348 = vsel %vm345, %v302, %v304
      %v349 = vsel %vm345, %v304, %v306
      %v350 = vsel %vm345, %v306, %v308
      %v351 = vsel %vm345, %v310, %v312
      %v352 = vsel %vm345, %v312, %v314
      %v353 = vsel %vm345, %v314, %v316
      %v354 = vsel %vm345, %v316, %v318
      %v355 = vsel %vm345, %v318, %v320
      %v356 = vsel %vm345, %v322, %v324
      %v357 = vsel %vm345, %v324, %v326
      %v358 = vsel %vm345, %v326, %v328
      %v359 = vsel %vm345, %v328, %v330
      %v360 = vsel %vm345, %v330, %v332
      %v361 = vsel %vm345, %v334, %v336
      %v362 = vsel %vm345, %v336, %v338
      %v363 = vsel %vm345, %v338, %v340
      %v364 = vsel %vm345, %v340, %v342
      %v365 = vsel %vm345, %v342, %v344
      %386 = vrot.lane.b32.xlu0 %v249, 118
      %v387 = vpop.permute.xlu0 %386
      %388 = vrot.lane.b32.xlu0 %v250, 118
      %v389 = vpop.permute.xlu0 %388
      %390 = vrot.lane.b32.xlu0 %v251, 118
      %v391 = vpop.permute.xlu0 %390
      %392 = vrot.lane.b32.xlu0 %v252, 118
      %v393 = vpop.permute.xlu0 %392
      %394 = vrot.lane.b32.xlu0 %v253, 118
      %v395 = vpop.permute.xlu0 %394
      %396 = vrot.lane.b32.xlu0 %v254, 118
      %v397 = vpop.permute.xlu0 %396
      %398 = vrot.lane.b32.xlu0 %v255, 118
      %v399 = vpop.permute.xlu0 %398
      %400 = vrot.lane.b32.xlu0 %v256, 118
      %v401 = vpop.permute.xlu0 %400
      %402 = vrot.lane.b32.xlu0 %v257, 118
      %v403 = vpop.permute.xlu0 %402
      %404 = vrot.lane.b32.xlu0 %v258, 118
      %v405 = vpop.permute.xlu0 %404
      %406 = vrot.lane.b32.xlu0 %v259, 118
      %v407 = vpop.permute.xlu0 %406
      %408 = vrot.lane.b32.xlu0 %v260, 118
      %v409 = vpop.permute.xlu0 %408
      %410 = vrot.lane.b32.xlu0 %v261, 118
      %v411 = vpop.permute.xlu0 %410
      %412 = vrot.lane.b32.xlu0 %v262, 118
      %v413 = vpop.permute.xlu0 %412
      %414 = vrot.lane.b32.xlu0 %v263, 118
      %v415 = vpop.permute.xlu0 %414
      %416 = vrot.lane.b32.xlu0 %v264, 118
      %v417 = vpop.permute.xlu0 %416
      %418 = vrot.lane.b32.xlu0 %v265, 118
      %v419 = vpop.permute.xlu0 %418
      %420 = vrot.lane.b32.xlu0 %v266, 118
      %v421 = vpop.permute.xlu0 %420
      %422 = vrot.lane.b32.xlu0 %v267, 118
      %v423 = vpop.permute.xlu0 %422
      %424 = vrot.lane.b32.xlu0 %v268, 118
      %v425 = vpop.permute.xlu0 %424
      %426 = vrot.lane.b32.xlu0 %v269, 118
      %v427 = vpop.permute.xlu0 %426
      %428 = vrot.lane.b32.xlu0 %v270, 118
      %v429 = vpop.permute.xlu0 %428
      %430 = vrot.lane.b32.xlu0 %v271, 118
      %v431 = vpop.permute.xlu0 %430
      %432 = vrot.lane.b32.xlu0 %v272, 118
      %v433 = vpop.permute.xlu0 %432
      %vm434 = vcmask 965632
      %v435 = vsel %vm434, %v387, %v389
      %v436 = vsel %vm434, %v389, %v391
      %v437 = vsel %vm434, %v391, %v393
      %v438 = vsel %vm434, %v393, %v395
      %v439 = vsel %vm434, %v395, %v397
      %v440 = vsel %vm434, %v399, %v401
      %v441 = vsel %vm434, %v401, %v403
      %v442 = vsel %vm434, %v403, %v405
      %v443 = vsel %vm434, %v405, %v407
      %v444 = vsel %vm434, %v407, %v409
      %v445 = vsel %vm434, %v411, %v413
      %v446 = vsel %vm434, %v413, %v415
      %v447 = vsel %vm434, %v415, %v417
      %v448 = vsel %vm434, %v417, %v419
      %v449 = vsel %vm434, %v419, %v421
      %v450 = vsel %vm434, %v423, %v425
      %v451 = vsel %vm434, %v425, %v427
      %v452 = vsel %vm434, %v427, %v429
      %v453 = vsel %vm434, %v429, %v431
      %v454 = vsel %vm434, %v431, %v433
      %475 = vrot.lane.b32.xlu0 %v249, 117
      %v476 = vpop.permute.xlu0 %475
      %477 = vrot.lane.b32.xlu0 %v250, 117
      %v478 = vpop.permute.xlu0 %477
      %479 = vrot.lane.b32.xlu0 %v251, 117
      %v480 = vpop.permute.xlu0 %479
      %481 = vrot.lane.b32.xlu0 %v252, 117
      %v482 = vpop.permute.xlu0 %481
      %483 = vrot.lane.b32.xlu0 %v253, 117
      %v484 = vpop.permute.xlu0 %483
      %485 = vrot.lane.b32.xlu0 %v254, 117
      %v486 = vpop.permute.xlu0 %485
      %487 = vrot.lane.b32.xlu0 %v255, 117
      %v488 = vpop.permute.xlu0 %487
      %489 = vrot.lane.b32.xlu0 %v256, 117
      %v490 = vpop.permute.xlu0 %489
      %491 = vrot.lane.b32.xlu0 %v257, 117
      %v492 = vpop.permute.xlu0 %491
      %493 = vrot.lane.b32.xlu0 %v258, 117
      %v494 = vpop.permute.xlu0 %493
      %495 = vrot.lane.b32.xlu0 %v259, 117
      %v496 = vpop.permute.xlu0 %495
      %497 = vrot.lane.b32.xlu0 %v260, 117
      %v498 = vpop.permute.xlu0 %497
      %499 = vrot.lane.b32.xlu0 %v261, 117
      %v500 = vpop.permute.xlu0 %499
      %501 = vrot.lane.b32.xlu0 %v262, 117
      %v502 = vpop.permute.xlu0 %501
      %503 = vrot.lane.b32.xlu0 %v263, 117
      %v504 = vpop.permute.xlu0 %503
      %505 = vrot.lane.b32.xlu0 %v264, 117
      %v506 = vpop.permute.xlu0 %505
      %507 = vrot.lane.b32.xlu0 %v265, 117
      %v508 = vpop.permute.xlu0 %507
      %509 = vrot.lane.b32.xlu0 %v266, 117
      %v510 = vpop.permute.xlu0 %509
      %511 = vrot.lane.b32.xlu0 %v267, 117
      %v512 = vpop.permute.xlu0 %511
      %513 = vrot.lane.b32.xlu0 %v268, 117
      %v514 = vpop.permute.xlu0 %513
      %515 = vrot.lane.b32.xlu0 %v269, 117
      %v516 = vpop.permute.xlu0 %515
      %517 = vrot.lane.b32.xlu0 %v270, 117
      %v518 = vpop.permute.xlu0 %517
      %519 = vrot.lane.b32.xlu0 %v271, 117
      %v520 = vpop.permute.xlu0 %519
      %521 = vrot.lane.b32.xlu0 %v272, 117
      %v522 = vpop.permute.xlu0 %521
      %vm523 = vcmask 957440
      %v524 = vsel %vm523, %v476, %v478
      %v525 = vsel %vm523, %v478, %v480
      %v526 = vsel %vm523, %v480, %v482
      %v527 = vsel %vm523, %v482, %v484
      %v528 = vsel %vm523, %v484, %v486
      %v529 = vsel %vm523, %v488, %v490
      %v530 = vsel %vm523, %v490, %v492
      %v531 = vsel %vm523, %v492, %v494
      %v532 = vsel %vm523, %v494, %v496
      %v533 = vsel %vm523, %v496, %v498
      %v534 = vsel %vm523, %v500, %v502
      %v535 = vsel %vm523, %v502, %v504
      %v536 = vsel %vm523, %v504, %v506
      %v537 = vsel %vm523, %v506, %v508
      %v538 = vsel %vm523, %v508, %v510
      %v539 = vsel %vm523, %v512, %v514
      %v540 = vsel %vm523, %v514, %v516
      %v541 = vsel %vm523, %v516, %v518
      %v542 = vsel %vm523, %v518, %v520
      %v543 = vsel %vm523, %v520, %v522
      %564 = vrot.lane.b32.xlu0 %v249, 28
      %v565 = vpop.permute.xlu0 %564
      %566 = vrot.lane.b32.xlu0 %v250, 28
      %v567 = vpop.permute.xlu0 %566
      %568 = vrot.lane.b32.xlu0 %v251, 28
      %v569 = vpop.permute.xlu0 %568
      %570 = vrot.lane.b32.xlu0 %v252, 28
      %v571 = vpop.permute.xlu0 %570
      %572 = vrot.lane.b32.xlu0 %v253, 28
      %v573 = vpop.permute.xlu0 %572
      %574 = vrot.lane.b32.xlu0 %v254, 28
      %v575 = vpop.permute.xlu0 %574
      %576 = vrot.lane.b32.xlu0 %v255, 28
      %v577 = vpop.permute.xlu0 %576
      %578 = vrot.lane.b32.xlu0 %v256, 28
      %v579 = vpop.permute.xlu0 %578
      %580 = vrot.lane.b32.xlu0 %v257, 28
      %v581 = vpop.permute.xlu0 %580
      %582 = vrot.lane.b32.xlu0 %v258, 28
      %v583 = vpop.permute.xlu0 %582
      %584 = vrot.lane.b32.xlu0 %v259, 28
      %v585 = vpop.permute.xlu0 %584
      %586 = vrot.lane.b32.xlu0 %v260, 28
      %v587 = vpop.permute.xlu0 %586
      %588 = vrot.lane.b32.xlu0 %v261, 28
      %v589 = vpop.permute.xlu0 %588
      %590 = vrot.lane.b32.xlu0 %v262, 28
      %v591 = vpop.permute.xlu0 %590
      %592 = vrot.lane.b32.xlu0 %v263, 28
      %v593 = vpop.permute.xlu0 %592
      %594 = vrot.lane.b32.xlu0 %v264, 28
      %v595 = vpop.permute.xlu0 %594
      %596 = vrot.lane.b32.xlu0 %v265, 28
      %v597 = vpop.permute.xlu0 %596
      %598 = vrot.lane.b32.xlu0 %v266, 28
      %v599 = vpop.permute.xlu0 %598
      %600 = vrot.lane.b32.xlu0 %v267, 28
      %v601 = vpop.permute.xlu0 %600
      %602 = vrot.lane.b32.xlu0 %v268, 28
      %v603 = vpop.permute.xlu0 %602
      %604 = vrot.lane.b32.xlu0 %v269, 28
      %v605 = vpop.permute.xlu0 %604
      %606 = vrot.lane.b32.xlu0 %v270, 28
      %v607 = vpop.permute.xlu0 %606
      %608 = vrot.lane.b32.xlu0 %v271, 28
      %v609 = vpop.permute.xlu0 %608
      %610 = vrot.lane.b32.xlu0 %v272, 28
      %v611 = vpop.permute.xlu0 %610
      %vm612 = vcmask 228352
      %v613 = vsel %vm612, %v565, %v567
      %v614 = vsel %vm612, %v567, %v569
      %v615 = vsel %vm612, %v569, %v571
      %v616 = vsel %vm612, %v571, %v573
      %v617 = vsel %vm612, %v573, %v575
      %v618 = vsel %vm612, %v577, %v579
      %v619 = vsel %vm612, %v579, %v581
      %v620 = vsel %vm612, %v581, %v583
      %v621 = vsel %vm612, %v583, %v585
      %v622 = vsel %vm612, %v585, %v587
      %v623 = vsel %vm612, %v589, %v591
      %v624 = vsel %vm612, %v591, %v593
      %v625 = vsel %vm612, %v593, %v595
      %v626 = vsel %vm612, %v595, %v597
      %v627 = vsel %vm612, %v597, %v599
      %v628 = vsel %vm612, %v601, %v603
      %v629 = vsel %vm612, %v603, %v605
      %v630 = vsel %vm612, %v605, %v607
      %v631 = vsel %vm612, %v607, %v609
      %v632 = vsel %vm612, %v609, %v611
      %653 = vrot.lane.b32.xlu0 %v249, 27
      %v654 = vpop.permute.xlu0 %653
      %655 = vrot.lane.b32.xlu0 %v250, 27
      %v656 = vpop.permute.xlu0 %655
      %657 = vrot.lane.b32.xlu0 %v251, 27
      %v658 = vpop.permute.xlu0 %657
      %659 = vrot.lane.b32.xlu0 %v252, 27
      %v660 = vpop.permute.xlu0 %659
      %661 = vrot.lane.b32.xlu0 %v253, 27
      %v662 = vpop.permute.xlu0 %661
      %663 = vrot.lane.b32.xlu0 %v254, 27
      %v664 = vpop.permute.xlu0 %663
      %665 = vrot.lane.b32.xlu0 %v255, 27
      %v666 = vpop.permute.xlu0 %665
      %667 = vrot.lane.b32.xlu0 %v256, 27
      %v668 = vpop.permute.xlu0 %667
      %669 = vrot.lane.b32.xlu0 %v257, 27
      %v670 = vpop.permute.xlu0 %669
      %671 = vrot.lane.b32.xlu0 %v258, 27
      %v672 = vpop.permute.xlu0 %671
      %673 = vrot.lane.b32.xlu0 %v259, 27
      %v674 = vpop.permute.xlu0 %673
      %675 = vrot.lane.b32.xlu0 %v260, 27
      %v676 = vpop.permute.xlu0 %675
      %677 = vrot.lane.b32.xlu0 %v261, 27
      %v678 = vpop.permute.xlu0 %677
      %679 = vrot.lane.b32.xlu0 %v262, 27
      %v680 = vpop.permute.xlu0 %679
      %681 = vrot.lane.b32.xlu0 %v263, 27
      %v682 = vpop.permute.xlu0 %681
      %683 = vrot.lane.b32.xlu0 %v264, 27
      %v684 = vpop.permute.xlu0 %683
      %685 = vrot.lane.b32.xlu0 %v265, 27
      %v686 = vpop.permute.xlu0 %685
      %687 = vrot.lane.b32.xlu0 %v266, 27
      %v688 = vpop.permute.xlu0 %687
      %689 = vrot.lane.b32.xlu0 %v267, 27
      %v690 = vpop.permute.xlu0 %689
      %691 = vrot.lane.b32.xlu0 %v268, 27
      %v692 = vpop.permute.xlu0 %691
      %693 = vrot.lane.b32.xlu0 %v269, 27
      %v694 = vpop.permute.xlu0 %693
      %695 = vrot.lane.b32.xlu0 %v270, 27
      %v696 = vpop.permute.xlu0 %695
      %697 = vrot.lane.b32.xlu0 %v271, 27
      %v698 = vpop.permute.xlu0 %697
      %699 = vrot.lane.b32.xlu0 %v272, 27
      %v700 = vpop.permute.xlu0 %699
      %vm701 = vcmask 220160
      %v702 = vsel %vm701, %v654, %v656
      %v703 = vsel %vm701, %v656, %v658
      %v704 = vsel %vm701, %v658, %v660
      %v705 = vsel %vm701, %v660, %v662
      %v706 = vsel %vm701, %v662, %v664
      %v707 = vsel %vm701, %v666, %v668
      %v708 = vsel %vm701, %v668, %v670
      %v709 = vsel %vm701, %v670, %v672
      %v710 = vsel %vm701, %v672, %v674
      %v711 = vsel %vm701, %v674, %v676
      %v712 = vsel %vm701, %v678, %v680
      %v713 = vsel %vm701, %v680, %v682
      %v714 = vsel %vm701, %v682, %v684
      %v715 = vsel %vm701, %v684, %v686
      %v716 = vsel %vm701, %v686, %v688
      %v717 = vsel %vm701, %v690, %v692
      %v718 = vsel %vm701, %v692, %v694
      %v719 = vsel %vm701, %v694, %v696
      %v720 = vsel %vm701, %v696, %v698
      %v721 = vsel %vm701, %v698, %v700
      %742 = vrot.lane.b32.xlu0 %v249, 18
      %v743 = vpop.permute.xlu0 %742
      %744 = vrot.lane.b32.xlu0 %v250, 18
      %v745 = vpop.permute.xlu0 %744
      %746 = vrot.lane.b32.xlu0 %v251, 18
      %v747 = vpop.permute.xlu0 %746
      %748 = vrot.lane.b32.xlu0 %v252, 18
      %v749 = vpop.permute.xlu0 %748
      %750 = vrot.lane.b32.xlu0 %v253, 18
      %v751 = vpop.permute.xlu0 %750
      %752 = vrot.lane.b32.xlu0 %v254, 18
      %v753 = vpop.permute.xlu0 %752
      %754 = vrot.lane.b32.xlu0 %v255, 18
      %v755 = vpop.permute.xlu0 %754
      %756 = vrot.lane.b32.xlu0 %v256, 18
      %v757 = vpop.permute.xlu0 %756
      %758 = vrot.lane.b32.xlu0 %v257, 18
      %v759 = vpop.permute.xlu0 %758
      %760 = vrot.lane.b32.xlu0 %v258, 18
      %v761 = vpop.permute.xlu0 %760
      %762 = vrot.lane.b32.xlu0 %v259, 18
      %v763 = vpop.permute.xlu0 %762
      %764 = vrot.lane.b32.xlu0 %v260, 18
      %v765 = vpop.permute.xlu0 %764
      %766 = vrot.lane.b32.xlu0 %v261, 18
      %v767 = vpop.permute.xlu0 %766
      %768 = vrot.lane.b32.xlu0 %v262, 18
      %v769 = vpop.permute.xlu0 %768
      %770 = vrot.lane.b32.xlu0 %v263, 18
      %v771 = vpop.permute.xlu0 %770
      %772 = vrot.lane.b32.xlu0 %v264, 18
      %v773 = vpop.permute.xlu0 %772
      %774 = vrot.lane.b32.xlu0 %v265, 18
      %v775 = vpop.permute.xlu0 %774
      %776 = vrot.lane.b32.xlu0 %v266, 18
      %v777 = vpop.permute.xlu0 %776
      %778 = vrot.lane.b32.xlu0 %v267, 18
      %v779 = vpop.permute.xlu0 %778
      %780 = vrot.lane.b32.xlu0 %v268, 18
      %v781 = vpop.permute.xlu0 %780
      %782 = vrot.lane.b32.xlu0 %v269, 18
      %v783 = vpop.permute.xlu0 %782
      %784 = vrot.lane.b32.xlu0 %v270, 18
      %v785 = vpop.permute.xlu0 %784
      %786 = vrot.lane.b32.xlu0 %v271, 18
      %v787 = vpop.permute.xlu0 %786
      %788 = vrot.lane.b32.xlu0 %v272, 18
      %v789 = vpop.permute.xlu0 %788
      %vm790 = vcmask 146432
      %v791 = vsel %vm790, %v743, %v745
      %v792 = vsel %vm790, %v745, %v747
      %v793 = vsel %vm790, %v747, %v749
      %v794 = vsel %vm790, %v749, %v751
      %v795 = vsel %vm790, %v751, %v753
      %v796 = vsel %vm790, %v755, %v757
      %v797 = vsel %vm790, %v757, %v759
      %v798 = vsel %vm790, %v759, %v761
      %v799 = vsel %vm790, %v761, %v763
      %v800 = vsel %vm790, %v763, %v765
      %v801 = vsel %vm790, %v767, %v769
      %v802 = vsel %vm790, %v769, %v771
      %v803 = vsel %vm790, %v771, %v773
      %v804 = vsel %vm790, %v773, %v775
      %v805 = vsel %vm790, %v775, %v777
      %v806 = vsel %vm790, %v779, %v781
      %v807 = vsel %vm790, %v781, %v783
      %v808 = vsel %vm790, %v783, %v785
      %v809 = vsel %vm790, %v785, %v787
      %v810 = vsel %vm790, %v787, %v789
      %831 = vrot.lane.b32.xlu0 %v249, 17
      %v832 = vpop.permute.xlu0 %831
      %833 = vrot.lane.b32.xlu0 %v250, 17
      %v834 = vpop.permute.xlu0 %833
      %835 = vrot.lane.b32.xlu0 %v251, 17
      %v836 = vpop.permute.xlu0 %835
      %837 = vrot.lane.b32.xlu0 %v252, 17
      %v838 = vpop.permute.xlu0 %837
      %839 = vrot.lane.b32.xlu0 %v253, 17
      %v840 = vpop.permute.xlu0 %839
      %841 = vrot.lane.b32.xlu0 %v254, 17
      %v842 = vpop.permute.xlu0 %841
      %843 = vrot.lane.b32.xlu0 %v255, 17
      %v844 = vpop.permute.xlu0 %843
      %845 = vrot.lane.b32.xlu0 %v256, 17
      %v846 = vpop.permute.xlu0 %845
      %847 = vrot.lane.b32.xlu0 %v257, 17
      %v848 = vpop.permute.xlu0 %847
      %849 = vrot.lane.b32.xlu0 %v258, 17
      %v850 = vpop.permute.xlu0 %849
      %851 = vrot.lane.b32.xlu0 %v259, 17
      %v852 = vpop.permute.xlu0 %851
      %853 = vrot.lane.b32.xlu0 %v260, 17
      %v854 = vpop.permute.xlu0 %853
      %855 = vrot.lane.b32.xlu0 %v261, 17
      %v856 = vpop.permute.xlu0 %855
      %857 = vrot.lane.b32.xlu0 %v262, 17
      %v858 = vpop.permute.xlu0 %857
      %859 = vrot.lane.b32.xlu0 %v263, 17
      %v860 = vpop.permute.xlu0 %859
      %861 = vrot.lane.b32.xlu0 %v264, 17
      %v862 = vpop.permute.xlu0 %861
      %863 = vrot.lane.b32.xlu0 %v265, 17
      %v864 = vpop.permute.xlu0 %863
      %865 = vrot.lane.b32.xlu0 %v266, 17
      %v866 = vpop.permute.xlu0 %865
      %867 = vrot.lane.b32.xlu0 %v267, 17
      %v868 = vpop.permute.xlu0 %867
      %869 = vrot.lane.b32.xlu0 %v268, 17
      %v870 = vpop.permute.xlu0 %869
      %871 = vrot.lane.b32.xlu0 %v269, 17
      %v872 = vpop.permute.xlu0 %871
      %873 = vrot.lane.b32.xlu0 %v270, 17
      %v874 = vpop.permute.xlu0 %873
      %875 = vrot.lane.b32.xlu0 %v271, 17
      %v876 = vpop.permute.xlu0 %875
      %877 = vrot.lane.b32.xlu0 %v272, 17
      %v878 = vpop.permute.xlu0 %877
      %vm879 = vcmask 138240
      %v880 = vsel %vm879, %v832, %v834
      %v881 = vsel %vm879, %v834, %v836
      %v882 = vsel %vm879, %v836, %v838
      %v883 = vsel %vm879, %v838, %v840
      %v884 = vsel %vm879, %v840, %v842
      %v885 = vsel %vm879, %v844, %v846
      %v886 = vsel %vm879, %v846, %v848
      %v887 = vsel %vm879, %v848, %v850
      %v888 = vsel %vm879, %v850, %v852
      %v889 = vsel %vm879, %v852, %v854
      %v890 = vsel %vm879, %v856, %v858
      %v891 = vsel %vm879, %v858, %v860
      %v892 = vsel %vm879, %v860, %v862
      %v893 = vsel %vm879, %v862, %v864
      %v894 = vsel %vm879, %v864, %v866
      %v895 = vsel %vm879, %v868, %v870
      %v896 = vsel %vm879, %v870, %v872
      %v897 = vsel %vm879, %v872, %v874
      %v898 = vsel %vm879, %v874, %v876
      %v899 = vsel %vm879, %v876, %v878
      %v920 = vpack.c.bf16 %v255, %v249
      %v921 = vpack.c.bf16 %v256, %v250
      %v922 = vpack.c.bf16 %v257, %v251
      %v923 = vpack.c.bf16 %v258, %v252
      %v924 = vpack.c.bf16 %v259, %v253
      %v925 = vpack.c.bf16 %v267, %v261
      %v926 = vpack.c.bf16 %v268, %v262
      %v927 = vpack.c.bf16 %v269, %v263
      %v928 = vpack.c.bf16 %v270, %v264
      %v929 = vpack.c.bf16 %v271, %v265
      %v930 = vpack.c.bf16 %v351, %v346
      %v931 = vpack.c.bf16 %v352, %v347
      %v932 = vpack.c.bf16 %v353, %v348
      %v933 = vpack.c.bf16 %v354, %v349
      %v934 = vpack.c.bf16 %v355, %v350
      %v935 = vpack.c.bf16 %v361, %v356
      %v936 = vpack.c.bf16 %v362, %v357
      %v937 = vpack.c.bf16 %v363, %v358
      %v938 = vpack.c.bf16 %v364, %v359
      %v939 = vpack.c.bf16 %v365, %v360
      %v940 = vpack.c.bf16 %v440, %v435
      %v941 = vpack.c.bf16 %v441, %v436
      %v942 = vpack.c.bf16 %v442, %v437
      %v943 = vpack.c.bf16 %v443, %v438
      %v944 = vpack.c.bf16 %v444, %v439
      %v945 = vpack.c.bf16 %v450, %v445
      %v946 = vpack.c.bf16 %v451, %v446
      %v947 = vpack.c.bf16 %v452, %v447
      %v948 = vpack.c.bf16 %v453, %v448
      %v949 = vpack.c.bf16 %v454, %v449
      %v950 = vpack.c.bf16 %v529, %v524
      %v951 = vpack.c.bf16 %v530, %v525
      %v952 = vpack.c.bf16 %v531, %v526
      %v953 = vpack.c.bf16 %v532, %v527
      %v954 = vpack.c.bf16 %v533, %v528
      %v955 = vpack.c.bf16 %v539, %v534
      %v956 = vpack.c.bf16 %v540, %v535
      %v957 = vpack.c.bf16 %v541, %v536
      %v958 = vpack.c.bf16 %v542, %v537
      %v959 = vpack.c.bf16 %v543, %v538
      %v960 = vpack.c.bf16 %v618, %v613
      %v961 = vpack.c.bf16 %v619, %v614
      %v962 = vpack.c.bf16 %v620, %v615
      %v963 = vpack.c.bf16 %v621, %v616
      %v964 = vpack.c.bf16 %v622, %v617
      %v965 = vpack.c.bf16 %v628, %v623
      %v966 = vpack.c.bf16 %v629, %v624
      %v967 = vpack.c.bf16 %v630, %v625
      %v968 = vpack.c.bf16 %v631, %v626
      %v969 = vpack.c.bf16 %v632, %v627
      %v970 = vpack.c.bf16 %v707, %v702
      %v971 = vpack.c.bf16 %v708, %v703
      %v972 = vpack.c.bf16 %v709, %v704
      %v973 = vpack.c.bf16 %v710, %v705
      %v974 = vpack.c.bf16 %v711, %v706
      %v975 = vpack.c.bf16 %v717, %v712
      %v976 = vpack.c.bf16 %v718, %v713
      %v977 = vpack.c.bf16 %v719, %v714
      %v978 = vpack.c.bf16 %v720, %v715
      %v979 = vpack.c.bf16 %v721, %v716
      %v980 = vpack.c.bf16 %v796, %v791
      %v981 = vpack.c.bf16 %v797, %v792
      %v982 = vpack.c.bf16 %v798, %v793
      %v983 = vpack.c.bf16 %v799, %v794
      %v984 = vpack.c.bf16 %v800, %v795
      %v985 = vpack.c.bf16 %v806, %v801
      %v986 = vpack.c.bf16 %v807, %v802
      %v987 = vpack.c.bf16 %v808, %v803
      %v988 = vpack.c.bf16 %v809, %v804
      %v989 = vpack.c.bf16 %v810, %v805
      %v990 = vpack.c.bf16 %v885, %v880
      %v991 = vpack.c.bf16 %v886, %v881
      %v992 = vpack.c.bf16 %v887, %v882
      %v993 = vpack.c.bf16 %v888, %v883
      %v994 = vpack.c.bf16 %v889, %v884
      %v995 = vpack.c.bf16 %v895, %v890
      %v996 = vpack.c.bf16 %v896, %v891
      %v997 = vpack.c.bf16 %v897, %v892
      %v998 = vpack.c.bf16 %v898, %v893
      %v999 = vpack.c.bf16 %v899, %v894
      %v1000 = vld [vmem:[%s1] sm:$0xff]
      %v1002 = vunpack.c.l.b16 %v1000
      %v1003 = vunpack.c.h.b16 %v1000
      %v1004 = vpack.c.b16 %v1002, %v1002
      %v1005 = vpack.c.b16 %v1003, %v1003
      %1008 = vmatprep.subr.bf16.mxu0 %v921
      %1009 = vmatpush1.bf16.msra.mxu0 %v920
      %1010 = vmatprep.subr.bf16.mxu0 %v926
      %1011 = vmatpush1.bf16.msra.mxu0 %v925
      %1012 = vmatprep.subr.bf16.mxu0 %v931
      %1013 = vmatpush1.bf16.msra.mxu0 %v930
      %1014 = vmatprep.subr.bf16.mxu0 %v936
      %1015 = vmatpush1.bf16.msra.mxu0 %v935
      %1016 = vmatprep.subr.bf16.mxu0 %v941
      %1017 = vmatpush1.bf16.msra.mxu0 %v940
      %1018 = vmatprep.subr.bf16.mxu0 %v946
      %1019 = vmatpush1.bf16.msra.mxu0 %v945
      %1020 = vmatprep.subr.bf16.mxu0 %v951
      %1021 = vmatpush1.bf16.msra.mxu0 %v950
      %1022 = vmatprep.subr.bf16.mxu0 %v956
      %1023 = vmatpush1.bf16.msra.mxu0 %v955
      %1024 = vmatprep.subr.bf16.mxu0 %v961
      %1025 = vmatpush1.bf16.msra.mxu0 %v960
      %1026 = vmatprep.subr.bf16.mxu0 %v966
      %1027 = vmatpush1.bf16.msra.mxu0 %v965
      %1028 = vmatprep.subr.bf16.mxu0 %v971
      %1029 = vmatpush1.bf16.msra.mxu0 %v970
      %1030 = vmatprep.subr.bf16.mxu0 %v976
      %1031 = vmatpush1.bf16.msra.mxu0 %v975
      %1032 = vmatprep.subr.bf16.mxu0 %v981
      %1033 = vmatpush1.bf16.msra.mxu0 %v980
      %1034 = vmatprep.subr.bf16.mxu0 %v986
      %1035 = vmatpush1.bf16.msra.mxu0 %v985
      %1036 = vmatprep.subr.bf16.mxu0 %v991
      %1037 = vmatpush1.bf16.msra.mxu0 %v990
      %1038 = vmatprep.subr.bf16.mxu0 %v996
      %1039 = vmatpush1.bf16.msra.mxu0 %v995
      %1040 = vmatprep.mubr.bf16.mxu0 %v1005
      %1041 = vmatmul.mubr.bf16.gmra.mrb[0].mxu0 %v1004
      %v1042 = vpop.f32.mrb[0].mxu0
      %v1043 = vadd.f32 0.0, %v1042
      %v1044 = vpop.f32.mrb[0].mxu0
      %v1045 = vadd.f32 0.0, %v1044
      %v1046 = vpop.f32.mrb[0].mxu0
      %v1047 = vpop.f32.mrb[0].mxu0
      %1048 = vdwg.mxu0
      %1049 = vmatprep.subr.bf16.mxu0 %v923
      %1050 = vmatpush1.bf16.msra.mxu0 %v922
      %1051 = vmatprep.subr.bf16.mxu0 %v928
      %1052 = vmatpush1.bf16.msra.mxu0 %v927
      %1053 = vmatprep.subr.bf16.mxu0 %v933
      %1054 = vmatpush1.bf16.msra.mxu0 %v932
      %1055 = vmatprep.subr.bf16.mxu0 %v938
      %1056 = vmatpush1.bf16.msra.mxu0 %v937
      %1057 = vmatprep.subr.bf16.mxu0 %v943
      %1058 = vmatpush1.bf16.msra.mxu0 %v942
      %1059 = vmatprep.subr.bf16.mxu0 %v948
      %1060 = vmatpush1.bf16.msra.mxu0 %v947
      %1061 = vmatprep.subr.bf16.mxu0 %v953
      %1062 = vmatpush1.bf16.msra.mxu0 %v952
      %1063 = vmatprep.subr.bf16.mxu0 %v958
      %1064 = vmatpush1.bf16.msra.mxu0 %v957
      %1065 = vmatprep.subr.bf16.mxu0 %v963
      %1066 = vmatpush1.bf16.msra.mxu0 %v962
      %1067 = vmatprep.subr.bf16.mxu0 %v968
      %1068 = vmatpush1.bf16.msra.mxu0 %v967
      %1069 = vmatprep.subr.bf16.mxu0 %v973
      %1070 = vmatpush1.bf16.msra.mxu0 %v972
      %1071 = vmatprep.subr.bf16.mxu0 %v978
      %1072 = vmatpush1.bf16.msra.mxu0 %v977
      %1073 = vmatprep.subr.bf16.mxu0 %v983
      %1074 = vmatpush1.bf16.msra.mxu0 %v982
      %1075 = vmatprep.subr.bf16.mxu0 %v988
      %1076 = vmatpush1.bf16.msra.mxu0 %v987
      %1077 = vmatprep.subr.bf16.mxu0 %v993
      %1078 = vmatpush1.bf16.msra.mxu0 %v992
      %1079 = vmatprep.subr.bf16.mxu0 %v998
      %1080 = vmatpush1.bf16.msra.mxu0 %v997
      %1081 = vmatprep.mubr.bf16.mxu0 %v1005
      %1082 = vmatmul.mubr.bf16.gmra.mrb[0].mxu0 %v1004
      %v1083 = vpop.f32.mrb[0].mxu0
      %v1084 = vadd.f32 0.0, %v1083
      %v1085 = vpop.f32.mrb[0].mxu0
      %v1086 = vadd.f32 0.0, %v1085
      %v1087 = vpop.f32.mrb[0].mxu0
      %v1088 = vpop.f32.mrb[0].mxu0
      %1089 = vdwg.mxu0
      %1090 = vmatprep.subr.bf16.mxu0 0
      %1091 = vmatpush1.bf16.msra.mxu0 %v924
      %1092 = vmatprep.subr.bf16.mxu0 0
      %1093 = vmatpush1.bf16.msra.mxu0 %v929
      %1094 = vmatprep.subr.bf16.mxu0 0
      %1095 = vmatpush1.bf16.msra.mxu0 %v934
      %1096 = vmatprep.subr.bf16.mxu0 0
      %1097 = vmatpush1.bf16.msra.mxu0 %v939
      %1098 = vmatprep.subr.bf16.mxu0 0
      %1099 = vmatpush1.bf16.msra.mxu0 %v944
      %1100 = vmatprep.subr.bf16.mxu0 0
      %1101 = vmatpush1.bf16.msra.mxu0 %v949
      %1102 = vmatprep.subr.bf16.mxu0 0
      %1103 = vmatpush1.bf16.msra.mxu0 %v954
      %1104 = vmatprep.subr.bf16.mxu0 0
      %1105 = vmatpush1.bf16.msra.mxu0 %v959
      %1106 = vmatprep.subr.bf16.mxu0 0
      %1107 = vmatpush1.bf16.msra.mxu0 %v964
      %1108 = vmatprep.subr.bf16.mxu0 0
      %1109 = vmatpush1.bf16.msra.mxu0 %v969
      %1110 = vmatprep.subr.bf16.mxu0 0
      %1111 = vmatpush1.bf16.msra.mxu0 %v974
      %1112 = vmatprep.subr.bf16.mxu0 0
      %1113 = vmatpush1.bf16.msra.mxu0 %v979
      %1114 = vmatprep.subr.bf16.mxu0 0
      %1115 = vmatpush1.bf16.msra.mxu0 %v984
      %1116 = vmatprep.subr.bf16.mxu0 0
      %1117 = vmatpush1.bf16.msra.mxu0 %v989
      %1118 = vmatprep.subr.bf16.mxu0 0
      %1119 = vmatpush1.bf16.msra.mxu0 %v994
      %1120 = vmatprep.subr.bf16.mxu0 0
      %1121 = vmatpush1.bf16.msra.mxu0 %v999
      %1122 = vmatprep.mubr.bf16.mxu0 %v1005
      %1123 = vmatmul.mubr.bf16.gmra.mrb[0].mxu0 %v1004
      %v1124 = vpop.f32.mrb[0].mxu0
      %v1125 = vadd.f32 0.0, %v1124
      %v1126 = vpop.f32.mrb[0].mxu0
      %v1127 = vpop.f32.mrb[0].mxu0
      %v1128 = vpop.f32.mrb[0].mxu0
      %1129 = vdwg.mxu0
      %v1130 = vld [vmem:[%s163] sm:$0x1f]
      %v1132 = vlaneseq
      %v1133 = vshrl.u32 %v1132, 7
      %v1134 = vsub.s32 0, %v1133
      %v1135 = vrot.slane %v1130, %v1134
      %v1136 = vlaneseq
      %v1137 = vshrl.u32 %v1136, 7
      %v1138 = vsub.s32 1, %v1137
      %v1139 = vrot.slane %v1130, %v1138
      %v1140 = vlaneseq
      %v1141 = vshrl.u32 %v1140, 7
      %v1142 = vsub.s32 2, %v1141
      %v1143 = vrot.slane %v1130, %v1142
      %v1144 = vlaneseq
      %v1145 = vshrl.u32 %v1144, 7
      %v1146 = vsub.s32 3, %v1145
      %v1147 = vrot.slane %v1130, %v1146
      %v1148 = vlaneseq
      %v1149 = vshrl.u32 %v1148, 7
      %v1150 = vsub.s32 4, %v1149
      %v1151 = vrot.slane %v1130, %v1150
      %v1157 = vmul.f32 %v1043, %v1135
      %v1158 = vmul.f32 %v1045, %v1139
      %v1159 = vmul.f32 %v1084, %v1143
      %v1160 = vmul.f32 %v1086, %v1147
      %v1161 = vmul.f32 %v1125, %v1151
      %v1162 = vpack.c.bf16 %v1157, %v1157
      %v1163 = vpack.c.bf16 %v1158, %v1158
      %v1164 = vpack.c.bf16 %v1159, %v1159
      %v1165 = vpack.c.bf16 %v1160, %v1160
      %v1166 = vpack.c.bf16 %v1161, %v1161
      %v1172 = vunpack.c.l.b16 %v1162
      %v1173 = vunpack.c.l.b16 %v1163
      %v1174 = vunpack.c.l.b16 %v1164
      %v1175 = vunpack.c.l.b16 %v1165
      %v1176 = vunpack.c.l.b16 %v1166
      %v1177 = vpack.c.b16 %v1173, %v1172
      %v1178 = vpack.c.b16 %v1175, %v1174
      %v1179 = vpack.c.b16 %v1176, %v1176
      %1183 = vst [vmem:[%s169] sm:$0xff] %v1177
      %1184 = vst [vmem:[%s169 + $0x8] sm:$0xff] %v1178
      %1185 = vst [vmem:[%s169 + $0x10] sm:$0xf] %v1179
      %s1186 = smul.u32 5, %s14
      %p1187 = scmp.lt.s32.totalorder %s1186, 14
      %s1188 = scalar_select %p1187, %s1186, 14
      %s1189 = smul.addr %s1188, 4
      %s1190 = scalar_lea.vmem %s3, %s1189
      // Predicated region
      $region33: #{unet_innermost_forward.2} parent=31 // pred_check
        %p1191 = pneg %p100
      $region34: #{unet_innermost_forward.2} parent=31 // pred_check_branch
        %1193 = sbr.rel (%p1191) target = $region36
      $region35: #{unet_innermost_forward.2} parent=31 // pred_region
        %s1194 = smul.u32 5, %s14
      $region36: #{unet_innermost_forward.2} parent=31 // pred_fallthru
        _
    $region32: #{unet_innermost_forward.2} parent=5 // pred_fallthru
      _
    %p1195 = scmp.le.s32.totalorder 2, %s9
    // Predicated region
    $region37: #{unet_innermost_forward.2} parent=5 // pred_check
      %p1196 = pneg %p1195
    $region38: #{unet_innermost_forward.2} parent=5 // pred_check_branch
      %1198 = sbr.rel (%p1196) target = $region40
    $region39: #{unet_innermost_forward.2} parent=5 // pred_region
      %s1199 = ssub.s32 %s9, 2
      // Predicated region
      $region41: #{unet_innermost_forward.2} parent=39 // pred_check
        %p1200 = pneg %p106
      $region42: #{unet_innermost_forward.2} parent=39 // pred_check_branch
        %1202 = sbr.rel (%p1200) target = $region44
      $region43: #{unet_innermost_forward.2} parent=39 // pred_region
        %s1203 = smul.u32 5, %s15
        %p1204 = scmp.lt.s32.totalorder %s1203, 14
        %s1205 = scalar_select %p1204, %s1203, 14
        %s1206 = smul.addr %s1205, 4
        %s1207 = scalar_lea.vmem %s3, %s1206
      $region44: #{unet_innermost_forward.2} parent=39 // pred_fallthru
        _
    $region40: #{unet_innermost_forward.2} parent=5 // pred_fallthru
      _
  $region6: #{unet_innermost_forward.2} parent=0 // loop_footer
    %s13 = sadd.s32 1, %s9
  $region7: #{unet_innermost_forward.2} parent=0 // loop_footer_branch
    %8 = sbr.rel target = $region3
  $region8: #{unet_innermost_forward.2} parent=0 // loop_exit
    _

// kernel: unet_innermost_forward.3
$region0: #{unet_innermost_forward.3}
  #allocation0 [shape = 'u32[]', space=smem, size = 0x4, offset = 0x4, fixed_abs, tag = 'smem constant byte address 0x4 - core index']
  #allocation1 [shape = 'u32[144,128]{1,0:T(1,128)}', space=vmem, size = 0x12000, scoped, tag = 'internal scratch']
  %s0 = inlined_call_operand.vmem [shape: bf16[8,1920], index: 0, kind: input, shape index: {}]
  %s1 = inlined_call_operand.vmem [shape: bf16[32,216], index: 1, kind: input, shape index: {}]
  %s2 = inlined_call_operand.vmem [shape: f32[1,1280], index: 2, kind: input, shape index: {}]
  %s3 = inlined_call_operand.vmem [shape: bf16[32,1280], index: 3, kind: output, shape index: {0}]
  %s4 = inlined_call_operand.vmem [shape: f32[32,1], index: 4, kind: output, shape index: {1}]
  %s5 = inlined_call_operand.vmem [shape: f32[32,1], index: 5, kind: output, shape index: {2}]
  %6 = xla_tuple %s3, %s4, %s5
  %s7 = sld [smem:[#allocation0]]
  $region87: #{unet_innermost_forward.3} parent=0
    _
  %s9 = ssub.s32 1, %s7
  %s10 = scalar_select 0, %s9, %s7
  $region1: #{unet_innermost_forward.3} parent=0
    #allocation2 [shape = 'u8[81920]{0}', space=vmem, size = 0x14000, scoped, tag = 'output window, operand 0']
    loop: start=0, step=1, limit=4
    $region2: #{unet_innermost_forward.3} parent=1 // loop_pre_header
      _
    $region3: #{unet_innermost_forward.3} parent=1 // loop_header
      %s12 = sphi 0, %s16
      %p13 = scmp.ge.s32.totalorder %s12, 4
      %s20 = sphi 0, %s20
      %s22 = sphi 0, %s20
      %s23 = sphi 0, %s22
      %s37 = sphi 0, %s23
      %s41 = sphi 0, %s41
      %s43 = sphi 0, %s41
      %s44 = sphi 0, %s43
      %s58 = sphi 0, %s44
      %s64 = sphi 0, %s66
      %s67 = sphi 0, %s64
      %s68 = sphi 0, %s67
      %s84 = sphi 0, %s68
      %s90 = sphi 0, %s92
      %s93 = sphi 0, %s90
      %s94 = sphi 0, %s93
      %s110 = sphi 0, %s94
      %s114 = sphi 0, %s114
      %s116 = sphi 0, %s114
      %s117 = sphi 0, %s116
      %s131 = sphi 0, %s117
      %s135 = sphi 0, %s135
      %s137 = sphi 0, %s135
      %s138 = sphi 0, %s137
      %s152 = sphi 0, %s138
    $region4: #{unet_innermost_forward.3} parent=1 // loop_header_branch
      %15 = sbr.rel (%p13) target = $region8
    $region5: #{unet_innermost_forward.3} parent=1 // loop_body
      %s17 = ssub.s32 %s12, 1
      %s18 = ssub.s32 %s12, 2
      %s19 = sadd.s32 %s12, 1
      %s21 = sadd.s32 %s20, 1
      %p24 = scmp.eq.s32.totalorder %s12, 1
      %p25 = scmp.ne.s32.totalorder %s20, %s22
      %p26 = scmp.eq.s32.totalorder %s12, 0
      %p27 = por %p25, %p26
      %p28 = scmp.ne.s32.totalorder %s20, %s22
      %p29 = scmp.eq.s32.totalorder %s17, 1
      %p30 = por %p28, %p29
      %p31 = scmp.ne.s32.totalorder %s22, %s23
      %p32 = scmp.eq.s32.totalorder %s17, 0
      %p33 = por %p31, %p32
      %p34 = scmp.ne.s32.totalorder %s22, %s23
      %p35 = scmp.eq.s32.totalorder %s18, 1
      %p36 = por %p34, %p35
      %p38 = scmp.ne.s32.totalorder %s23, %s37
      %p39 = scmp.eq.s32.totalorder %s18, 0
      %p40 = por %p38, %p39
      %s42 = sadd.s32 %s41, 1
      %p45 = scmp.eq.s32.totalorder %s12, 1
      %p46 = scmp.ne.s32.totalorder %s41, %s43
      %p47 = scmp.eq.s32.totalorder %s12, 0
      %p48 = por %p46, %p47
      %p49 = scmp.ne.s32.totalorder %s41, %s43
      %p50 = scmp.eq.s32.totalorder %s17, 1
      %p51 = por %p49, %p50
      %p52 = scmp.ne.s32.totalorder %s43, %s44
      %p53 = scmp.eq.s32.totalorder %s17, 0
      %p54 = por %p52, %p53
      %p55 = scmp.ne.s32.totalorder %s43, %s44
      %p56 = scmp.eq.s32.totalorder %s18, 1
      %p57 = por %p55, %p56
      %p59 = scmp.ne.s32.totalorder %s44, %s58
      %p60 = scmp.eq.s32.totalorder %s18, 0
      %p61 = por %p59, %p60
      %s62 = ssub.s32 %s12, %s19
      %p63 = scmp.eq.s32.totalorder %s62, 0
      %s65 = sadd.s32 %s64, 1
      %s66 = scalar_select %p63, %s64, %s65
      %p69 = pneg %p63
      %p70 = scmp.eq.s32.totalorder %s12, 1
      %p71 = por %p69, %p70
      %p72 = scmp.ne.s32.totalorder %s64, %s67
      %p73 = scmp.eq.s32.totalorder %s12, 0
      %p74 = por %p72, %p73
      %p75 = scmp.ne.s32.totalorder %s64, %s67
      %p76 = scmp.eq.s32.totalorder %s17, 1
      %p77 = por %p75, %p76
      %p78 = scmp.ne.s32.totalorder %s67, %s68
      %p79 = scmp.eq.s32.totalorder %s17, 0
      %p80 = por %p78, %p79
      %p81 = scmp.ne.s32.totalorder %s67, %s68
      %p82 = scmp.eq.s32.totalorder %s18, 1
      %p83 = por %p81, %p82
      %p85 = scmp.ne.s32.totalorder %s68, %s84
      %p86 = scmp.eq.s32.totalorder %s18, 0
      %p87 = por %p85, %p86
      %s88 = ssub.s32 %s12, %s19
      %p89 = scmp.eq.s32.totalorder %s88, 0
      %s91 = sadd.s32 %s90, 1
      %s92 = scalar_select %p89, %s90, %s91
      %p95 = pneg %p89
      %p96 = scmp.eq.s32.totalorder %s12, 1
      %p97 = por %p95, %p96
      %p98 = scmp.ne.s32.totalorder %s90, %s93
      %p99 = scmp.eq.s32.totalorder %s12, 0
      %p100 = por %p98, %p99
      %p101 = scmp.ne.s32.totalorder %s90, %s93
      %p102 = scmp.eq.s32.totalorder %s17, 1
      %p103 = por %p101, %p102
      %p104 = scmp.ne.s32.totalorder %s93, %s94
      %p105 = scmp.eq.s32.totalorder %s17, 0
      %p106 = por %p104, %p105
      %p107 = scmp.ne.s32.totalorder %s93, %s94
      %p108 = scmp.eq.s32.totalorder %s18, 1
      %p109 = por %p107, %p108
      %p111 = scmp.ne.s32.totalorder %s94, %s110
      %p112 = scmp.eq.s32.totalorder %s18, 0
      %p113 = por %p111, %p112
      %s115 = sadd.s32 %s114, 1
      %p118 = scmp.eq.s32.totalorder %s12, 1
      %p119 = scmp.ne.s32.totalorder %s114, %s116
      %p120 = scmp.eq.s32.totalorder %s12, 0
      %p121 = por %p119, %p120
      %p122 = scmp.ne.s32.totalorder %s114, %s116
      %p123 = scmp.eq.s32.totalorder %s17, 1
      %p124 = por %p122, %p123
      %p125 = scmp.ne.s32.totalorder %s116, %s117
      %p126 = scmp.eq.s32.totalorder %s17, 0
      %p127 = por %p125, %p126
      %p128 = scmp.ne.s32.totalorder %s116, %s117
      %p129 = scmp.eq.s32.totalorder %s18, 1
      %p130 = por %p128, %p129
      %p132 = scmp.ne.s32.totalorder %s117, %s131
      %p133 = scmp.eq.s32.totalorder %s18, 0
      %p134 = por %p132, %p133
      %s136 = sadd.s32 %s135, 1
      %p139 = scmp.eq.s32.totalorder %s12, 1
      %p140 = scmp.ne.s32.totalorder %s135, %s137
      %p141 = scmp.eq.s32.totalorder %s12, 0
      %p142 = por %p140, %p141
      %p143 = scmp.ne.s32.totalorder %s135, %s137
      %p144 = scmp.eq.s32.totalorder %s17, 1
      %p145 = por %p143, %p144
      %p146 = scmp.ne.s32.totalorder %s137, %s138
      %p147 = scmp.eq.s32.totalorder %s17, 0
      %p148 = por %p146, %p147
      %p149 = scmp.ne.s32.totalorder %s137, %s138
      %p150 = scmp.eq.s32.totalorder %s18, 1
      %p151 = por %p149, %p150
      %p153 = scmp.ne.s32.totalorder %s138, %s152
      %p154 = scmp.eq.s32.totalorder %s18, 0
      %p155 = por %p153, %p154
      %p156 = scmp.le.s32.totalorder 1, %s12
      %p157 = scmp.lt.s32.totalorder %s12, 3
      %p158 = pnand %p156, %p157
      %p159 = pneg %p158
      // Predicated region
      $region9: #{unet_innermost_forward.3} parent=5 // pred_check
        _
      $region10: #{unet_innermost_forward.3} parent=5 // pred_check_branch
        %161 = sbr.rel (%p158) target = $region12
      $region11: #{unet_innermost_forward.3} parent=5 // pred_region
        %s162 = ssub.s32 %s12, 1
        // Predicated region
        $region13: #{unet_innermost_forward.3} parent=11 // pred_check
          %p163 = pneg %p33
        $region14: #{unet_innermost_forward.3} parent=11 // pred_check_branch
          %165 = sbr.rel (%p163) target = $region16
        $region15: #{unet_innermost_forward.3} parent=11 // pred_region
          _
        $region16: #{unet_innermost_forward.3} parent=11 // pred_fallthru
          _
        // Predicated region
        $region17: #{unet_innermost_forward.3} parent=11 // pred_check
          %p166 = pneg %p54
        $region18: #{unet_innermost_forward.3} parent=11 // pred_check_branch
          %168 = sbr.rel (%p166) target = $region20
        $region19: #{unet_innermost_forward.3} parent=11 // pred_region
          _
        $region20: #{unet_innermost_forward.3} parent=11 // pred_fallthru
          _
      $region12: #{unet_innermost_forward.3} parent=5 // pred_fallthru
        _
      %p169 = scmp.lt.s32.totalorder %s12, 2
      // Predicated region
      $region21: #{unet_innermost_forward.3} parent=5 // pred_check
        %p170 = pneg %p169
      $region22: #{unet_innermost_forward.3} parent=5 // pred_check_branch
        %172 = sbr.rel (%p170) target = $region24
      $region23: #{unet_innermost_forward.3} parent=5 // pred_region
        // Predicated region
        $region25: #{unet_innermost_forward.3} parent=23 // pred_check
          %p173 = pneg %p74
        $region26: #{unet_innermost_forward.3} parent=23 // pred_check_branch
          %175 = sbr.rel (%p173) target = $region28
        $region27: #{unet_innermost_forward.3} parent=23 // pred_region
          %s176 = smul.u32 5, %s12
          %p177 = scmp.lt.s32.totalorder %s176, 9
          %s178 = scalar_select %p177, %s176, 9
          %s179 = scalar_lea.vmem %s2, %s178
          %s180 = smul.u32 5, %s12
        $region28: #{unet_innermost_forward.3} parent=23 // pred_fallthru
          _
      $region24: #{unet_innermost_forward.3} parent=5 // pred_fallthru
        _
      %p181 = scmp.le.s32.totalorder 1, %s12
      %p182 = scmp.lt.s32.totalorder %s12, 3
      %p183 = pnand %p181, %p182
      %p184 = pneg %p183
      // Predicated region
      $region29: #{unet_innermost_forward.3} parent=5 // pred_check
        _
      $region30: #{unet_innermost_forward.3} parent=5 // pred_check_branch
        %186 = sbr.rel (%p183) target = $region32
      $region31: #{unet_innermost_forward.3} parent=5 // pred_region
        %s187 = ssub.s32 %s12, 1
        %p188 = pneg %p33
        %p189 = pneg %p30
        %p190 = pneg %p54
        %p191 = pneg %p51
        %s192 = smul.u32 5, %s17
        %p193 = scmp.lt.s32.totalorder %s192, 9
        %s194 = scalar_select %p193, %s192, 9
        %s195 = scalar_lea.vmem %s2, %s194
        %p196 = pneg %p80
        %p197 = pneg %p77
        %p198 = pneg %p106
        %p199 = pneg %p103
        %s200 = sand.u32 %s93, 1
        %s201 = sand.u32 %s93, 1
        %s202 = smul.addr %s201, 80
        %s203 = scalar_lea.vmem [#allocation2], %s202
        %p204 = pneg %p127
        %p205 = pneg %p124
        %p206 = pneg %p148
        %p207 = pneg %p145
        %s208 = smul.u32 5, %s17
        %p209 = scmp.lt.s32.totalorder %s208, 9
        %s210 = scalar_select %p209, %s208, 9
        %s211 = scalar_lea.vmem %s2, %s210
        %s212 = smul.u32 5, %s17
        %s213 = smul.u32 5, %s17
        %s215 = smul.u32 %s17, 640
        %s216 = sshra.s32 %s215, 7
        %s217 = sand.u32 %s215, 127
        %s218 = smul.addr %s216, 4
        %s219 = scalar_lea.vmem %s0, %s218
        %v220 = vld [vmem:[%s219] sm:$0xff]
        %v221 = vld [vmem:[%s219 + $0x8] sm:$0xff]
        %v222 = vld [vmem:[%s219 + $0x10] sm:$0xff]
        %v223 = vld [vmem:[%s219 + $0x18] sm:$0xf]
        %v224 = vunpack.c.l.bf16 %v220
        %v225 = vunpack.c.h.bf16 %v220
        %v226 = vunpack.c.l.bf16 %v221
        %v227 = vunpack.c.h.bf16 %v221
        %v228 = vunpack.c.l.bf16 %v222
        %v229 = vunpack.c.h.bf16 %v222
        %v230 = vunpack.c.l.bf16 %v223
        %vm231 = vcmp.ge.f32.partialorder %v224, 0.0
        %vm232 = vcmp.ge.f32.partialorder %v225, 0.0
        %vm233 = vcmp.ge.f32.partialorder %v226, 0.0
        %vm234 = vcmp.ge.f32.partialorder %v227, 0.0
        %vm235 = vcmp.ge.f32.partialorder %v228, 0.0
        %vm236 = vcmp.ge.f32.partialorder %v229, 0.0
        %vm237 = vcmp.ge.f32.partialorder %v230, 0.0
        %v238 = vmul.f32 %v224, 0.0
        %v239 = vmul.f32 %v225, 0.0
        %v240 = vmul.f32 %v226, 0.0
        %v241 = vmul.f32 %v227, 0.0
        %v242 = vmul.f32 %v228, 0.0
        %v243 = vmul.f32 %v229, 0.0
        %v244 = vmul.f32 %v230, 0.0
        %v245 = vsel %vm231, %v224, %v238
        %v246 = vsel %vm232, %v225, %v239
        %v247 = vsel %vm233, %v226, %v240
        %v248 = vsel %vm234, %v227, %v241
        %v249 = vsel %vm235, %v228, %v242
        %v250 = vsel %vm236, %v229, %v243
        %v251 = vsel %vm237, %v230, %v244
        %258 = vrot.lane.b32.xlu0 %v245, 127
        %v259 = vpop.permute.xlu0 %258
        %260 = vrot.lane.b32.xlu0 %v246, 127
        %v261 = vpop.permute.xlu0 %260
        %262 = vrot.lane.b32.xlu0 %v247, 127
        %v263 = vpop.permute.xlu0 %262
        %264 = vrot.lane.b32.xlu0 %v248, 127
        %v265 = vpop.permute.xlu0 %264
        %266 = vrot.lane.b32.xlu0 %v249, 127
        %v267 = vpop.permute.xlu0 %266
        %268 = vrot.lane.b32.xlu0 %v250, 127
        %v269 = vpop.permute.xlu0 %268
        %vm270 = vcmask 1039360
        %v271 = vsel %vm270, %v259, %v261
        %v272 = vsel %vm270, %v261, %v263
        %v273 = vsel %vm270, %v263, %v265
        %v274 = vsel %vm270, %v265, %v267
        %v275 = vsel %vm270, %v267, %v269
        %281 = vrot.lane.b32.xlu0 %v245, 126
        %v282 = vpop.permute.xlu0 %281
        %283 = vrot.lane.b32.xlu0 %v246, 126
        %v284 = vpop.permute.xlu0 %283
        %285 = vrot.lane.b32.xlu0 %v247, 126
        %v286 = vpop.permute.xlu0 %285
        %287 = vrot.lane.b32.xlu0 %v248, 126
        %v288 = vpop.permute.xlu0 %287
        %289 = vrot.lane.b32.xlu0 %v249, 126
        %v290 = vpop.permute.xlu0 %289
        %291 = vrot.lane.b32.xlu0 %v250, 126
        %v292 = vpop.permute.xlu0 %291
        %vm293 = vcmask 1031168
        %v294 = vsel %vm293, %v282, %v284
        %v295 = vsel %vm293, %v284, %v286
        %v296 = vsel %vm293, %v286, %v288
        %v297 = vsel %vm293, %v288, %v290
        %v298 = vsel %vm293, %v290, %v292
        %304 = vrot.lane.b32.xlu0 %v245, 118
        %v305 = vpop.permute.xlu0 %304
        %306 = vrot.lane.b32.xlu0 %v246, 118
        %v307 = vpop.permute.xlu0 %306
        %308 = vrot.lane.b32.xlu0 %v247, 118
        %v309 = vpop.permute.xlu0 %308
        %310 = vrot.lane.b32.xlu0 %v248, 118
        %v311 = vpop.permute.xlu0 %310
        %312 = vrot.lane.b32.xlu0 %v249, 118
        %v313 = vpop.permute.xlu0 %312
        %314 = vrot.lane.b32.xlu0 %v250, 118
        %v315 = vpop.permute.xlu0 %314
        %vm316 = vcmask 965632
        %v317 = vsel %vm316, %v305, %v307
        %v318 = vsel %vm316, %v307, %v309
        %v319 = vsel %vm316, %v309, %v311
        %v320 = vsel %vm316, %v311, %v313
        %v321 = vsel %vm316, %v313, %v315
        %327 = vrot.lane.b32.xlu0 %v245, 117
        %v328 = vpop.permute.xlu0 %327
        %329 = vrot.lane.b32.xlu0 %v246, 117
        %v330 = vpop.permute.xlu0 %329
        %331 = vrot.lane.b32.xlu0 %v247, 117
        %v332 = vpop.permute.xlu0 %331
        %333 = vrot.lane.b32.xlu0 %v248, 117
        %v334 = vpop.permute.xlu0 %333
        %335 = vrot.lane.b32.xlu0 %v249, 117
        %v336 = vpop.permute.xlu0 %335
        %337 = vrot.lane.b32.xlu0 %v250, 117
        %v338 = vpop.permute.xlu0 %337
        %vm339 = vcmask 957440
        %v340 = vsel %vm339, %v328, %v330
        %v341 = vsel %vm339, %v330, %v332
        %v342 = vsel %vm339, %v332, %v334
        %v343 = vsel %vm339, %v334, %v336
        %v344 = vsel %vm339, %v336, %v338
        %350 = vrot.lane.b32.xlu0 %v245, 116
        %v351 = vpop.permute.xlu0 %350
        %352 = vrot.lane.b32.xlu0 %v246, 116
        %v353 = vpop.permute.xlu0 %352
        %354 = vrot.lane.b32.xlu0 %v247, 116
        %v355 = vpop.permute.xlu0 %354
        %356 = vrot.lane.b32.xlu0 %v248, 116
        %v357 = vpop.permute.xlu0 %356
        %358 = vrot.lane.b32.xlu0 %v249, 116
        %v359 = vpop.permute.xlu0 %358
        %360 = vrot.lane.b32.xlu0 %v250, 116
        %v361 = vpop.permute.xlu0 %360
        %vm362 = vcmask 949248
        %v363 = vsel %vm362, %v351, %v353
        %v364 = vsel %vm362, %v353, %v355
        %v365 = vsel %vm362, %v355, %v357
        %v366 = vsel %vm362, %v357, %v359
        %v367 = vsel %vm362, %v359, %v361
        %373 = vrot.lane.b32.xlu0 %v245, 108
        %v374 = vpop.permute.xlu0 %373
        %375 = vrot.lane.b32.xlu0 %v246, 108
        %v376 = vpop.permute.xlu0 %375
        %377 = vrot.lane.b32.xlu0 %v247, 108
        %v378 = vpop.permute.xlu0 %377
        %379 = vrot.lane.b32.xlu0 %v248, 108
        %v380 = vpop.permute.xlu0 %379
        %381 = vrot.lane.b32.xlu0 %v249, 108
        %v382 = vpop.permute.xlu0 %381
        %383 = vrot.lane.b32.xlu0 %v250, 108
        %v384 = vpop.permute.xlu0 %383
        %vm385 = vcmask 883712
        %v386 = vsel %vm385, %v374, %v376
        %v387 = vsel %vm385, %v376, %v378
        %v388 = vsel %vm385, %v378, %v380
        %v389 = vsel %vm385, %v380, %v382
        %v390 = vsel %vm385, %v382, %v384
        %396 = vrot.lane.b32.xlu0 %v245, 107
        %v397 = vpop.permute.xlu0 %396
        %398 = vrot.lane.b32.xlu0 %v246, 107
        %v399 = vpop.permute.xlu0 %398
        %400 = vrot.lane.b32.xlu0 %v247, 107
        %v401 = vpop.permute.xlu0 %400
        %402 = vrot.lane.b32.xlu0 %v248, 107
        %v403 = vpop.permute.xlu0 %402
        %404 = vrot.lane.b32.xlu0 %v249, 107
        %v405 = vpop.permute.xlu0 %404
        %406 = vrot.lane.b32.xlu0 %v250, 107
        %v407 = vpop.permute.xlu0 %406
        %vm408 = vcmask 875520
        %v409 = vsel %vm408, %v397, %v399
        %v410 = vsel %vm408, %v399, %v401
        %v411 = vsel %vm408, %v401, %v403
        %v412 = vsel %vm408, %v403, %v405
        %v413 = vsel %vm408, %v405, %v407
        %419 = vrot.lane.b32.xlu0 %v245, 106
        %v420 = vpop.permute.xlu0 %419
        %421 = vrot.lane.b32.xlu0 %v246, 106
        %v422 = vpop.permute.xlu0 %421
        %423 = vrot.lane.b32.xlu0 %v247, 106
        %v424 = vpop.permute.xlu0 %423
        %425 = vrot.lane.b32.xlu0 %v248, 106
        %v426 = vpop.permute.xlu0 %425
        %427 = vrot.lane.b32.xlu0 %v249, 106
        %v428 = vpop.permute.xlu0 %427
        %429 = vrot.lane.b32.xlu0 %v250, 106
        %v430 = vpop.permute.xlu0 %429
        %vm431 = vcmask 867328
        %v432 = vsel %vm431, %v420, %v422
        %v433 = vsel %vm431, %v422, %v424
        %v434 = vsel %vm431, %v424, %v426
        %v435 = vsel %vm431, %v426, %v428
        %v436 = vsel %vm431, %v428, %v430
        %442 = vrot.lane.b32.xlu0 %v245, 28
        %v443 = vpop.permute.xlu0 %442
        %444 = vrot.lane.b32.xlu0 %v246, 28
        %v445 = vpop.permute.xlu0 %444
        %446 = vrot.lane.b32.xlu0 %v247, 28
        %v447 = vpop.permute.xlu0 %446
        %448 = vrot.lane.b32.xlu0 %v248, 28
        %v449 = vpop.permute.xlu0 %448
        %450 = vrot.lane.b32.xlu0 %v249, 28
        %v451 = vpop.permute.xlu0 %450
        %452 = vrot.lane.b32.xlu0 %v250, 28
        %v453 = vpop.permute.xlu0 %452
        %vm454 = vcmask 228352
        %v455 = vsel %vm454, %v443, %v445
        %v456 = vsel %vm454, %v445, %v447
        %v457 = vsel %vm454, %v447, %v449
        %v458 = vsel %vm454, %v449, %v451
        %v459 = vsel %vm454, %v451, %v453
        %465 = vrot.lane.b32.xlu0 %v245, 27
        %v466 = vpop.permute.xlu0 %465
        %467 = vrot.lane.b32.xlu0 %v246, 27
        %v468 = vpop.permute.xlu0 %467
        %469 = vrot.lane.b32.xlu0 %v247, 27
        %v470 = vpop.permute.xlu0 %469
        %471 = vrot.lane.b32.xlu0 %v248, 27
        %v472 = vpop.permute.xlu0 %471
        %473 = vrot.lane.b32.xlu0 %v249, 27
        %v474 = vpop.permute.xlu0 %473
        %475 = vrot.lane.b32.xlu0 %v250, 27
        %v476 = vpop.permute.xlu0 %475
        %vm477 = vcmask 220160
        %v478 = vsel %vm477, %v466, %v468
        %v479 = vsel %vm477, %v468, %v470
        %v480 = vsel %vm477, %v470, %v472
        %v481 = vsel %vm477, %v472, %v474
        %v482 = vsel %vm477, %v474, %v476
        %488 = vrot.lane.b32.xlu0 %v245, 26
        %v489 = vpop.permute.xlu0 %488
        %490 = vrot.lane.b32.xlu0 %v246, 26
        %v491 = vpop.permute.xlu0 %490
        %492 = vrot.lane.b32.xlu0 %v247, 26
        %v493 = vpop.permute.xlu0 %492
        %494 = vrot.lane.b32.xlu0 %v248, 26
        %v495 = vpop.permute.xlu0 %494
        %496 = vrot.lane.b32.xlu0 %v249, 26
        %v497 = vpop.permute.xlu0 %496
        %498 = vrot.lane.b32.xlu0 %v250, 26
        %v499 = vpop.permute.xlu0 %498
        %vm500 = vcmask 211968
        %v501 = vsel %vm500, %v489, %v491
        %v502 = vsel %vm500, %v491, %v493
        %v503 = vsel %vm500, %v493, %v495
        %v504 = vsel %vm500, %v495, %v497
        %v505 = vsel %vm500, %v497, %v499
        %511 = vrot.lane.b32.xlu0 %v245, 18
        %v512 = vpop.permute.xlu0 %511
        %513 = vrot.lane.b32.xlu0 %v246, 18
        %v514 = vpop.permute.xlu0 %513
        %515 = vrot.lane.b32.xlu0 %v247, 18
        %v516 = vpop.permute.xlu0 %515
        %517 = vrot.lane.b32.xlu0 %v248, 18
        %v518 = vpop.permute.xlu0 %517
        %519 = vrot.lane.b32.xlu0 %v249, 18
        %v520 = vpop.permute.xlu0 %519
        %521 = vrot.lane.b32.xlu0 %v250, 18
        %v522 = vpop.permute.xlu0 %521
        %vm523 = vcmask 146432
        %v524 = vsel %vm523, %v512, %v514
        %v525 = vsel %vm523, %v514, %v516
        %v526 = vsel %vm523, %v516, %v518
        %v527 = vsel %vm523, %v518, %v520
        %v528 = vsel %vm523, %v520, %v522
        %534 = vrot.lane.b32.xlu0 %v245, 17
        %v535 = vpop.permute.xlu0 %534
        %536 = vrot.lane.b32.xlu0 %v246, 17
        %v537 = vpop.permute.xlu0 %536
        %538 = vrot.lane.b32.xlu0 %v247, 17
        %v539 = vpop.permute.xlu0 %538
        %540 = vrot.lane.b32.xlu0 %v248, 17
        %v541 = vpop.permute.xlu0 %540
        %542 = vrot.lane.b32.xlu0 %v249, 17
        %v543 = vpop.permute.xlu0 %542
        %544 = vrot.lane.b32.xlu0 %v250, 17
        %v545 = vpop.permute.xlu0 %544
        %vm546 = vcmask 138240
        %v547 = vsel %vm546, %v535, %v537
        %v548 = vsel %vm546, %v537, %v539
        %v549 = vsel %vm546, %v539, %v541
        %v550 = vsel %vm546, %v541, %v543
        %v551 = vsel %vm546, %v543, %v545
        %557 = vrot.lane.b32.xlu0 %v245, 16
        %v558 = vpop.permute.xlu0 %557
        %559 = vrot.lane.b32.xlu0 %v246, 16
        %v560 = vpop.permute.xlu0 %559
        %561 = vrot.lane.b32.xlu0 %v247, 16
        %v562 = vpop.permute.xlu0 %561
        %563 = vrot.lane.b32.xlu0 %v248, 16
        %v564 = vpop.permute.xlu0 %563
        %565 = vrot.lane.b32.xlu0 %v249, 16
        %v566 = vpop.permute.xlu0 %565
        %567 = vrot.lane.b32.xlu0 %v250, 16
        %v568 = vpop.permute.xlu0 %567
        %vm569 = vcmask 130048
        %v570 = vsel %vm569, %v558, %v560
        %v571 = vsel %vm569, %v560, %v562
        %v572 = vsel %vm569, %v562, %v564
        %v573 = vsel %vm569, %v564, %v566
        %v574 = vsel %vm569, %v566, %v568
        %580 = vrot.lane.b32.xlu0 %v245, 8
        %v581 = vpop.permute.xlu0 %580
        %582 = vrot.lane.b32.xlu0 %v246, 8
        %v583 = vpop.permute.xlu0 %582
        %584 = vrot.lane.b32.xlu0 %v247, 8
        %v585 = vpop.permute.xlu0 %584
        %586 = vrot.lane.b32.xlu0 %v248, 8
        %v587 = vpop.permute.xlu0 %586
        %588 = vrot.lane.b32.xlu0 %v249, 8
        %v589 = vpop.permute.xlu0 %588
        %590 = vrot.lane.b32.xlu0 %v250, 8
        %v591 = vpop.permute.xlu0 %590
        %vm592 = vcmask 64512
        %v593 = vsel %vm592, %v581, %v583
        %v594 = vsel %vm592, %v583, %v585
        %v595 = vsel %vm592, %v585, %v587
        %v596 = vsel %vm592, %v587, %v589
        %v597 = vsel %vm592, %v589, %v591
        %604 = vrot.lane.b32.xlu0 %v246, 49
        %v605 = vpop.permute.xlu0 %604
        %606 = vrot.lane.b32.xlu0 %v247, 49
        %v607 = vpop.permute.xlu0 %606
        %608 = vrot.lane.b32.xlu0 %v248, 49
        %v609 = vpop.permute.xlu0 %608
        %610 = vrot.lane.b32.xlu0 %v249, 49
        %v611 = vpop.permute.xlu0 %610
        %612 = vrot.lane.b32.xlu0 %v250, 49
        %v613 = vpop.permute.xlu0 %612
        %614 = vrot.lane.b32.xlu0 %v251, 49
        %v615 = vpop.permute.xlu0 %614
        %vm616 = vcmask 400384
        %v617 = vsel %vm616, %v605, %v607
        %v618 = vsel %vm616, %v607, %v609
        %v619 = vsel %vm616, %v609, %v611
        %v620 = vsel %vm616, %v611, %v613
        %v621 = vsel %vm616, %v613, %v615
        %622 = vrot.lane.b32.xlu0 %v246, 48
        %v623 = vpop.permute.xlu0 %622
        %624 = vrot.lane.b32.xlu0 %v247, 48
        %v625 = vpop.permute.xlu0 %624
        %626 = vrot.lane.b32.xlu0 %v248, 48
        %v627 = vpop.permute.xlu0 %626
        %628 = vrot.lane.b32.xlu0 %v249, 48
        %v629 = vpop.permute.xlu0 %628
        %630 = vrot.lane.b32.xlu0 %v250, 48
        %v631 = vpop.permute.xlu0 %630
        %632 = vrot.lane.b32.xlu0 %v251, 48
        %v633 = vpop.permute.xlu0 %632
        %vm634 = vcmask 392192
        %v635 = vsel %vm634, %v623, %v625
        %v636 = vsel %vm634, %v625, %v627
        %v637 = vsel %vm634, %v627, %v629
        %v638 = vsel %vm634, %v629, %v631
        %v639 = vsel %vm634, %v631, %v633
        %640 = vrot.lane.b32.xlu0 %v246, 47
        %v641 = vpop.permute.xlu0 %640
        %642 = vrot.lane.b32.xlu0 %v247, 47
        %v643 = vpop.permute.xlu0 %642
        %644 = vrot.lane.b32.xlu0 %v248, 47
        %v645 = vpop.permute.xlu0 %644
        %646 = vrot.lane.b32.xlu0 %v249, 47
        %v647 = vpop.permute.xlu0 %646
        %648 = vrot.lane.b32.xlu0 %v250, 47
        %v649 = vpop.permute.xlu0 %648
        %650 = vrot.lane.b32.xlu0 %v251, 47
        %v651 = vpop.permute.xlu0 %650
        %vm652 = vcmask 384000
        %v653 = vsel %vm652, %v641, %v643
        %v654 = vsel %vm652, %v643, %v645
        %v655 = vsel %vm652, %v645, %v647
        %v656 = vsel %vm652, %v647, %v649
        %v657 = vsel %vm652, %v649, %v651
        %658 = vrot.lane.b32.xlu0 %v246, 39
        %v659 = vpop.permute.xlu0 %658
        %660 = vrot.lane.b32.xlu0 %v247, 39
        %v661 = vpop.permute.xlu0 %660
        %662 = vrot.lane.b32.xlu0 %v248, 39
        %v663 = vpop.permute.xlu0 %662
        %664 = vrot.lane.b32.xlu0 %v249, 39
        %v665 = vpop.permute.xlu0 %664
        %666 = vrot.lane.b32.xlu0 %v250, 39
        %v667 = vpop.permute.xlu0 %666
        %668 = vrot.lane.b32.xlu0 %v251, 39
        %v669 = vpop.permute.xlu0 %668
        %vm670 = vcmask 318464
        %v671 = vsel %vm670, %v659, %v661
        %v672 = vsel %vm670, %v661, %v663
        %v673 = vsel %vm670, %v663, %v665
        %v674 = vsel %vm670, %v665, %v667
        %v675 = vsel %vm670, %v667, %v669
        %676 = vrot.lane.b32.xlu0 %v246, 38
        %v677 = vpop.permute.xlu0 %676
        %678 = vrot.lane.b32.xlu0 %v247, 38
        %v679 = vpop.permute.xlu0 %678
        %680 = vrot.lane.b32.xlu0 %v248, 38
        %v681 = vpop.permute.xlu0 %680
        %682 = vrot.lane.b32.xlu0 %v249, 38
        %v683 = vpop.permute.xlu0 %682
        %684 = vrot.lane.b32.xlu0 %v250, 38
        %v685 = vpop.permute.xlu0 %684
        %686 = vrot.lane.b32.xlu0 %v251, 38
        %v687 = vpop.permute.xlu0 %686
        %vm688 = vcmask 310272
        %v689 = vsel %vm688, %v677, %v679
        %v690 = vsel %vm688, %v679, %v681
        %v691 = vsel %vm688, %v681, %v683
        %v692 = vsel %vm688, %v683, %v685
        %v693 = vsel %vm688, %v685, %v687
        %694 = vrot.lane.b32.xlu0 %v246, 37
        %v695 = vpop.permute.xlu0 %694
        %696 = vrot.lane.b32.xlu0 %v247, 37
        %v697 = vpop.permute.xlu0 %696
        %698 = vrot.lane.b32.xlu0 %v248, 37
        %v699 = vpop.permute.xlu0 %698
        %700 = vrot.lane.b32.xlu0 %v249, 37
        %v701 = vpop.permute.xlu0 %700
        %702 = vrot.lane.b32.xlu0 %v250, 37
        %v703 = vpop.permute.xlu0 %702
        %704 = vrot.lane.b32.xlu0 %v251, 37
        %v705 = vpop.permute.xlu0 %704
        %vm706 = vcmask 302080
        %v707 = vsel %vm706, %v695, %v697
        %v708 = vsel %vm706, %v697, %v699
        %v709 = vsel %vm706, %v699, %v701
        %v710 = vsel %vm706, %v701, %v703
        %v711 = vsel %vm706, %v703, %v705
        %712 = vrot.lane.b32.xlu0 %v246, 29
        %v713 = vpop.permute.xlu0 %712
        %714 = vrot.lane.b32.xlu0 %v247, 29
        %v715 = vpop.permute.xlu0 %714
        %716 = vrot.lane.b32.xlu0 %v248, 29
        %v717 = vpop.permute.xlu0 %716
        %718 = vrot.lane.b32.xlu0 %v249, 29
        %v719 = vpop.permute.xlu0 %718
        %720 = vrot.lane.b32.xlu0 %v250, 29
        %v721 = vpop.permute.xlu0 %720
        %722 = vrot.lane.b32.xlu0 %v251, 29
        %v723 = vpop.permute.xlu0 %722
        %vm724 = vcmask 236544
        %v725 = vsel %vm724, %v713, %v715
        %v726 = vsel %vm724, %v715, %v717
        %v727 = vsel %vm724, %v717, %v719
        %v728 = vsel %vm724, %v719, %v721
        %v729 = vsel %vm724, %v721, %v723
        %730 = vrot.lane.b32.xlu0 %v251, 28
        %v731 = vpop.permute.xlu0 %730
        %v732 = vsel %vm454, %v453, %v731
        %733 = vrot.lane.b32.xlu0 %v251, 27
        %v734 = vpop.permute.xlu0 %733
        %v735 = vsel %vm477, %v476, %v734
        %736 = vrot.lane.b32.xlu0 %v245, 7
        %v737 = vpop.permute.xlu0 %736
        %738 = vrot.lane.b32.xlu0 %v246, 7
        %v739 = vpop.permute.xlu0 %738
        %740 = vrot.lane.b32.xlu0 %v247, 7
        %v741 = vpop.permute.xlu0 %740
        %742 = vrot.lane.b32.xlu0 %v248, 7
        %v743 = vpop.permute.xlu0 %742
        %744 = vrot.lane.b32.xlu0 %v249, 7
        %v745 = vpop.permute.xlu0 %744
        %746 = vrot.lane.b32.xlu0 %v250, 7
        %v747 = vpop.permute.xlu0 %746
        %748 = vrot.lane.b32.xlu0 %v271, 7
        %v749 = vpop.permute.xlu0 %748
        %750 = vrot.lane.b32.xlu0 %v272, 7
        %v751 = vpop.permute.xlu0 %750
        %752 = vrot.lane.b32.xlu0 %v273, 7
        %v753 = vpop.permute.xlu0 %752
        %754 = vrot.lane.b32.xlu0 %v274, 7
        %v755 = vpop.permute.xlu0 %754
        %756 = vrot.lane.b32.xlu0 %v275, 7
        %v757 = vpop.permute.xlu0 %756
        %758 = vrot.lane.b32.xlu0 %v269, 7
        %v759 = vpop.permute.xlu0 %758
        %760 = vrot.lane.b32.xlu0 %v605, 7
        %v761 = vpop.permute.xlu0 %760
        %762 = vrot.lane.b32.xlu0 %v617, 7
        %v763 = vpop.permute.xlu0 %762
        %764 = vrot.lane.b32.xlu0 %v618, 7
        %v765 = vpop.permute.xlu0 %764
        %766 = vrot.lane.b32.xlu0 %v619, 7
        %v767 = vpop.permute.xlu0 %766
        %768 = vrot.lane.b32.xlu0 %v620, 7
        %v769 = vpop.permute.xlu0 %768
        %770 = vrot.lane.b32.xlu0 %v621, 7
        %v771 = vpop.permute.xlu0 %770
        %772 = vrot.lane.b32.xlu0 %v623, 7
        %v773 = vpop.permute.xlu0 %772
        %774 = vrot.lane.b32.xlu0 %v635, 7
        %v775 = vpop.permute.xlu0 %774
        %776 = vrot.lane.b32.xlu0 %v636, 7
        %v777 = vpop.permute.xlu0 %776
        %778 = vrot.lane.b32.xlu0 %v637, 7
        %v779 = vpop.permute.xlu0 %778
        %780 = vrot.lane.b32.xlu0 %v638, 7
        %v781 = vpop.permute.xlu0 %780
        %782 = vrot.lane.b32.xlu0 %v639, 7
        %v783 = vpop.permute.xlu0 %782
        %784 = vrot.lane.b32.xlu0 %v641, 7
        %v785 = vpop.permute.xlu0 %784
        %786 = vrot.lane.b32.xlu0 %v653, 7
        %v787 = vpop.permute.xlu0 %786
        %788 = vrot.lane.b32.xlu0 %v654, 7
        %v789 = vpop.permute.xlu0 %788
        %790 = vrot.lane.b32.xlu0 %v655, 7
        %v791 = vpop.permute.xlu0 %790
        %792 = vrot.lane.b32.xlu0 %v656, 7
        %v793 = vpop.permute.xlu0 %792
        %794 = vrot.lane.b32.xlu0 %v657, 7
        %v795 = vpop.permute.xlu0 %794
        %796 = vrot.lane.b32.xlu0 %v659, 7
        %v797 = vpop.permute.xlu0 %796
        %798 = vrot.lane.b32.xlu0 %v671, 7
        %v799 = vpop.permute.xlu0 %798
        %800 = vrot.lane.b32.xlu0 %v672, 7
        %v801 = vpop.permute.xlu0 %800
        %802 = vrot.lane.b32.xlu0 %v673, 7
        %v803 = vpop.permute.xlu0 %802
        %804 = vrot.lane.b32.xlu0 %v674, 7
        %v805 = vpop.permute.xlu0 %804
        %806 = vrot.lane.b32.xlu0 %v675, 7
        %v807 = vpop.permute.xlu0 %806
        %808 = vrot.lane.b32.xlu0 %v677, 7
        %v809 = vpop.permute.xlu0 %808
        %810 = vrot.lane.b32.xlu0 %v689, 7
        %v811 = vpop.permute.xlu0 %810
        %812 = vrot.lane.b32.xlu0 %v690, 7
        %v813 = vpop.permute.xlu0 %812
        %814 = vrot.lane.b32.xlu0 %v691, 7
        %v815 = vpop.permute.xlu0 %814
        %816 = vrot.lane.b32.xlu0 %v692, 7
        %v817 = vpop.permute.xlu0 %816
        %818 = vrot.lane.b32.xlu0 %v693, 7
        %v819 = vpop.permute.xlu0 %818
        %820 = vrot.lane.b32.xlu0 %v695, 7
        %v821 = vpop.permute.xlu0 %820
        %822 = vrot.lane.b32.xlu0 %v707, 7
        %v823 = vpop.permute.xlu0 %822
        %824 = vrot.lane.b32.xlu0 %v708, 7
        %v825 = vpop.permute.xlu0 %824
        %826 = vrot.lane.b32.xlu0 %v709, 7
        %v827 = vpop.permute.xlu0 %826
        %828 = vrot.lane.b32.xlu0 %v710, 7
        %v829 = vpop.permute.xlu0 %828
        %830 = vrot.lane.b32.xlu0 %v711, 7
        %v831 = vpop.permute.xlu0 %830
        %832 = vrot.lane.b32.xlu0 %v713, 7
        %v833 = vpop.permute.xlu0 %832
        %834 = vrot.lane.b32.xlu0 %v725, 7
        %v835 = vpop.permute.xlu0 %834
        %836 = vrot.lane.b32.xlu0 %v726, 7
        %v837 = vpop.permute.xlu0 %836
        %838 = vrot.lane.b32.xlu0 %v727, 7
        %v839 = vpop.permute.xlu0 %838
        %840 = vrot.lane.b32.xlu0 %v728, 7
        %v841 = vpop.permute.xlu0 %840
        %842 = vrot.lane.b32.xlu0 %v729, 7
        %v843 = vpop.permute.xlu0 %842
        %844 = vrot.lane.b32.xlu0 %v445, 7
        %v845 = vpop.permute.xlu0 %844
        %846 = vrot.lane.b32.xlu0 %v456, 7
        %v847 = vpop.permute.xlu0 %846
        %848 = vrot.lane.b32.xlu0 %v457, 7
        %v849 = vpop.permute.xlu0 %848
        %850 = vrot.lane.b32.xlu0 %v458, 7
        %v851 = vpop.permute.xlu0 %850
        %852 = vrot.lane.b32.xlu0 %v459, 7
        %v853 = vpop.permute.xlu0 %852
        %854 = vrot.lane.b32.xlu0 %v732, 7
        %v855 = vpop.permute.xlu0 %854
        %856 = vrot.lane.b32.xlu0 %v468, 7
        %v857 = vpop.permute.xlu0 %856
        %858 = vrot.lane.b32.xlu0 %v479, 7
        %v859 = vpop.permute.xlu0 %858
        %860 = vrot.lane.b32.xlu0 %v480, 7
        %v861 = vpop.permute.xlu0 %860
        %862 = vrot.lane.b32.xlu0 %v481, 7
        %v863 = vpop.permute.xlu0 %862
        %864 = vrot.lane.b32.xlu0 %v482, 7
        %v865 = vpop.permute.xlu0 %864
        %866 = vrot.lane.b32.xlu0 %v735, 7
        %v867 = vpop.permute.xlu0 %866
        %vm868 = vcmask 56320
        %v869 = vsel %vm868, %v737, %v739
        %v870 = vsel %vm868, %v739, %v741
        %v871 = vsel %vm868, %v741, %v743
        %v872 = vsel %vm868, %v743, %v745
        %v873 = vsel %vm868, %v745, %v747
        %v874 = vsel %vm868, %v749, %v751
        %v875 = vsel %vm868, %v751, %v753
        %v876 = vsel %vm868, %v753, %v755
        %v877 = vsel %vm868, %v755, %v757
        %v878 = vsel %vm868, %v757, %v759
        %v879 = vsel %vm868, %v761, %v763
        %v880 = vsel %vm868, %v763, %v765
        %v881 = vsel %vm868, %v765, %v767
        %v882 = vsel %vm868, %v767, %v769
        %v883 = vsel %vm868, %v769, %v771
        %v884 = vsel %vm868, %v773, %v775
        %v885 = vsel %vm868, %v775, %v777
        %v886 = vsel %vm868, %v777, %v779
        %v887 = vsel %vm868, %v779, %v781
        %v888 = vsel %vm868, %v781, %v783
        %v889 = vsel %vm868, %v785, %v787
        %v890 = vsel %vm868, %v787, %v789
        %v891 = vsel %vm868, %v789, %v791
        %v892 = vsel %vm868, %v791, %v793
        %v893 = vsel %vm868, %v793, %v795
        %v894 = vsel %vm868, %v797, %v799
        %v895 = vsel %vm868, %v799, %v801
        %v896 = vsel %vm868, %v801, %v803
        %v897 = vsel %vm868, %v803, %v805
        %v898 = vsel %vm868, %v805, %v807
        %v899 = vsel %vm868, %v809, %v811
        %v900 = vsel %vm868, %v811, %v813
        %v901 = vsel %vm868, %v813, %v815
        %v902 = vsel %vm868, %v815, %v817
        %v903 = vsel %vm868, %v817, %v819
        %v904 = vsel %vm868, %v821, %v823
        %v905 = vsel %vm868, %v823, %v825
        %v906 = vsel %vm868, %v825, %v827
        %v907 = vsel %vm868, %v827, %v829
        %v908 = vsel %vm868, %v829, %v831
        %v909 = vsel %vm868, %v833, %v835
        %v910 = vsel %vm868, %v835, %v837
        %v911 = vsel %vm868, %v837, %v839
        %v912 = vsel %vm868, %v839, %v841
        %v913 = vsel %vm868, %v841, %v843
        %v914 = vsel %vm868, %v845, %v847
        %v915 = vsel %vm868, %v847, %v849
        %v916 = vsel %vm868, %v849, %v851
        %v917 = vsel %vm868, %v851, %v853
        %v918 = vsel %vm868, %v853, %v855
        %v919 = vsel %vm868, %v857, %v859
        %v920 = vsel %vm868, %v859, %v861
        %v921 = vsel %vm868, %v861, %v863
        %v922 = vsel %vm868, %v863, %v865
        %v923 = vsel %vm868, %v865, %v867
        %v979 = vpack.c.bf16 %v271, %v245
        %v980 = vpack.c.bf16 %v272, %v246
        %v981 = vpack.c.bf16 %v273, %v247
        %v982 = vpack.c.bf16 %v274, %v248
        %v983 = vpack.c.bf16 %v275, %v249
        %v984 = vpack.c.bf16 %v317, %v294
        %v985 = vpack.c.bf16 %v318, %v295
        %v986 = vpack.c.bf16 %v319, %v296
        %v987 = vpack.c.bf16 %v320, %v297
        %v988 = vpack.c.bf16 %v321, %v298
        %v989 = vpack.c.bf16 %v363, %v340
        %v990 = vpack.c.bf16 %v364, %v341
        %v991 = vpack.c.bf16 %v365, %v342
        %v992 = vpack.c.bf16 %v366, %v343
        %v993 = vpack.c.bf16 %v367, %v344
        %v994 = vpack.c.bf16 %v409, %v386
        %v995 = vpack.c.bf16 %v410, %v387
        %v996 = vpack.c.bf16 %v411, %v388
        %v997 = vpack.c.bf16 %v412, %v389
        %v998 = vpack.c.bf16 %v413, %v390
        %v999 = vpack.c.bf16 %v455, %v432
        %v1000 = vpack.c.bf16 %v456, %v433
        %v1001 = vpack.c.bf16 %v457, %v434
        %v1002 = vpack.c.bf16 %v458, %v435
        %v1003 = vpack.c.bf16 %v459, %v436
        %v1004 = vpack.c.bf16 %v501, %v478
        %v1005 = vpack.c.bf16 %v502, %v479
        %v1006 = vpack.c.bf16 %v503, %v480
        %v1007 = vpack.c.bf16 %v504, %v481
        %v1008 = vpack.c.bf16 %v505, %v482
        %v1009 = vpack.c.bf16 %v547, %v524
        %v1010 = vpack.c.bf16 %v548, %v525
        %v1011 = vpack.c.bf16 %v549, %v526
        %v1012 = vpack.c.bf16 %v550, %v527
        %v1013 = vpack.c.bf16 %v551, %v528
        %v1014 = vpack.c.bf16 %v593, %v570
        %v1015 = vpack.c.bf16 %v594, %v571
        %v1016 = vpack.c.bf16 %v595, %v572
        %v1017 = vpack.c.bf16 %v596, %v573
        %v1018 = vpack.c.bf16 %v597, %v574
        %v1019 = vpack.c.bf16 %v874, %v869
        %v1020 = vpack.c.bf16 %v875, %v870
        %v1021 = vpack.c.bf16 %v876, %v871
        %v1022 = vpack.c.bf16 %v877, %v872
        %v1023 = vpack.c.bf16 %v878, %v873
        %v1024 = vpack.c.bf16 %v884, %v879
        %v1025 = vpack.c.bf16 %v885, %v880
        %v1026 = vpack.c.bf16 %v886, %v881
        %v1027 = vpack.c.bf16 %v887, %v882
        %v1028 = vpack.c.bf16 %v888, %v883
        %v1029 = vpack.c.bf16 %v894, %v889
        %v1030 = vpack.c.bf16 %v895, %v890
        %v1031 = vpack.c.bf16 %v896, %v891
        %v1032 = vpack.c.bf16 %v897, %v892
        %v1033 = vpack.c.bf16 %v898, %v893
        %v1034 = vpack.c.bf16 %v904, %v899
        %v1035 = vpack.c.bf16 %v905, %v900
        %v1036 = vpack.c.bf16 %v906, %v901
        %v1037 = vpack.c.bf16 %v907, %v902
        %v1038 = vpack.c.bf16 %v908, %v903
        %v1039 = vpack.c.bf16 %v914, %v909
        %v1040 = vpack.c.bf16 %v915, %v910
        %v1041 = vpack.c.bf16 %v916, %v911
        %v1042 = vpack.c.bf16 %v917, %v912
        %v1043 = vpack.c.bf16 %v918, %v913
        %v1044 = vpack.c.bf16 %v919, %v919
        %v1045 = vpack.c.bf16 %v920, %v920
        %v1046 = vpack.c.bf16 %v921, %v921
        %v1047 = vpack.c.bf16 %v922, %v922
        %v1048 = vpack.c.bf16 %v923, %v923
        %v1049 = vld [vmem:[%s1] sm:$0xff]
        %v1050 = vld [vmem:[%s1 + $0x8] sm:$0xff]
        %v1051 = vld [vmem:[%s1 + $0x10] sm:$0xff]
        %v1052 = vld [vmem:[%s1 + $0x18] sm:$0xff]
        %v1057 = vunpack.c.l.b16 %v1049
        %v1058 = vunpack.c.h.b16 %v1049
        %v1059 = vunpack.c.l.b16 %v1050
        %v1060 = vunpack.c.h.b16 %v1050
        %v1061 = vunpack.c.l.b16 %v1051
        %v1062 = vunpack.c.h.b16 %v1051
        %v1063 = vunpack.c.l.b16 %v1052
        %v1064 = vunpack.c.h.b16 %v1052
        %v1065 = vpack.c.b16 %v1059, %v1057
        %v1066 = vpack.c.b16 %v1060, %v1058
        %v1067 = vpack.c.b16 %v1063, %v1061
        %v1068 = vpack.c.b16 %v1064, %v1062
        %vm1071 = vcmask 719872
        %v1073 = vsel %vm1071, %v1066, 0
        %v1076 = vsel %vm1071, %v1068, 0
        %vm1078 = vcmask 1043456
        %v1080 = vsel %vm1078, %v1044, 0
        %v1083 = vsel %vm1078, %v1045, 0
        %v1086 = vsel %vm1078, %v1046, 0
        %v1089 = vsel %vm1078, %v1047, 0
        %v1092 = vsel %vm1078, %v1048, 0
        %1094 = vmatprep.subr.bf16.mxu0 %v980
        %1095 = vmatpush1.bf16.msra.mxu0 %v979
        %1096 = vmatprep.subr.bf16.mxu0 %v985
        %1097 = vmatpush1.bf16.msra.mxu0 %v984
        %1098 = vmatprep.subr.bf16.mxu0 %v990
        %1099 = vmatpush1.bf16.msra.mxu0 %v989
        %1100 = vmatprep.subr.bf16.mxu0 %v995
        %1101 = vmatpush1.bf16.msra.mxu0 %v994
        %1102 = vmatprep.subr.bf16.mxu0 %v1000
        %1103 = vmatpush1.bf16.msra.mxu0 %v999
        %1104 = vmatprep.subr.bf16.mxu0 %v1005
        %1105 = vmatpush1.bf16.msra.mxu0 %v1004
        %1106 = vmatprep.subr.bf16.mxu0 %v1010
        %1107 = vmatpush1.bf16.msra.mxu0 %v1009
        %1108 = vmatprep.subr.bf16.mxu0 %v1015
        %1109 = vmatpush1.bf16.msra.mxu0 %v1014
        %1110 = vmatprep.subr.bf16.mxu0 %v1020
        %1111 = vmatpush1.bf16.msra.mxu0 %v1019
        %1112 = vmatprep.subr.bf16.mxu0 %v1025
        %1113 = vmatpush1.bf16.msra.mxu0 %v1024
        %1114 = vmatprep.subr.bf16.mxu0 %v1030
        %1115 = vmatpush1.bf16.msra.mxu0 %v1029
        %1116 = vmatprep.subr.bf16.mxu0 %v1035
        %1117 = vmatpush1.bf16.msra.mxu0 %v1034
        %1118 = vmatprep.subr.bf16.mxu0 %v1040
        %1119 = vmatpush1.bf16.msra.mxu0 %v1039
        %1120 = vmatprep.subr.bf16.mxu0 %v1083
        %1121 = vmatpush1.bf16.msra.mxu0 %v1080
        %1122 = vmatprep.subr.bf16.mxu0 0
        %1123 = vmatpush1.bf16.msra.mxu0 0
        %1124 = vmatprep.subr.bf16.mxu0 0
        %1125 = vmatpush1.bf16.msra.mxu0 0
        %1126 = vmatprep.mubr.bf16.mxu0 %v1073
        %1127 = vmatmul.mubr.bf16.gmra.mrb[0].mxu0 %v1065
        %v1128 = vpop.f32.mrb[0].mxu0
        %v1129 = vadd.f32 0.0, %v1128
        %v1130 = vpop.f32.mrb[0].mxu0
        %v1131 = vadd.f32 0.0, %v1130
        %v1132 = vpop.f32.mrb[0].mxu0
        %v1133 = vadd.f32 0.0, %v1132
        %v1134 = vpop.f32.mrb[0].mxu0
        %v1135 = vadd.f32 0.0, %v1134
        %1136 = vmatprep.mubr.bf16.mxu0 %v1076
        %1137 = vmatmul.mubr.bf16.gmra.mrb[0].mxu0 %v1067
        %v1138 = vpop.f32.mrb[0].mxu0
        %v1139 = vadd.f32 0.0, %v1138
        %v1140 = vpop.f32.mrb[0].mxu0
        %v1141 = vadd.f32 0.0, %v1140
        %v1142 = vpop.f32.mrb[0].mxu0
        %v1143 = vadd.f32 0.0, %v1142
        %v1144 = vpop.f32.mrb[0].mxu0
        %v1145 = vadd.f32 0.0, %v1144
        %1146 = vdwg.mxu0
        %1147 = vmatprep.subr.bf16.mxu0 %v982
        %1148 = vmatpush1.bf16.msra.mxu0 %v981
        %1149 = vmatprep.subr.bf16.mxu0 %v987
        %1150 = vmatpush1.bf16.msra.mxu0 %v986
        %1151 = vmatprep.subr.bf16.mxu0 %v992
        %1152 = vmatpush1.bf16.msra.mxu0 %v991
        %1153 = vmatprep.subr.bf16.mxu0 %v997
        %1154 = vmatpush1.bf16.msra.mxu0 %v996
        %1155 = vmatprep.subr.bf16.mxu0 %v1002
        %1156 = vmatpush1.bf16.msra.mxu0 %v1001
        %1157 = vmatprep.subr.bf16.mxu0 %v1007
        %1158 = vmatpush1.bf16.msra.mxu0 %v1006
        %1159 = vmatprep.subr.bf16.mxu0 %v1012
        %1160 = vmatpush1.bf16.msra.mxu0 %v1011
        %1161 = vmatprep.subr.bf16.mxu0 %v1017
        %1162 = vmatpush1.bf16.msra.mxu0 %v1016
        %1163 = vmatprep.subr.bf16.mxu0 %v1022
        %1164 = vmatpush1.bf16.msra.mxu0 %v1021
        %1165 = vmatprep.subr.bf16.mxu0 %v1027
        %1166 = vmatpush1.bf16.msra.mxu0 %v1026
        %1167 = vmatprep.subr.bf16.mxu0 %v1032
        %1168 = vmatpush1.bf16.msra.mxu0 %v1031
        %1169 = vmatprep.subr.bf16.mxu0 %v1037
        %1170 = vmatpush1.bf16.msra.mxu0 %v1036
        %1171 = vmatprep.subr.bf16.mxu0 %v1042
        %1172 = vmatpush1.bf16.msra.mxu0 %v1041
        %1173 = vmatprep.subr.bf16.mxu0 %v1089
        %1174 = vmatpush1.bf16.msra.mxu0 %v1086
        %1175 = vmatprep.subr.bf16.mxu0 0
        %1176 = vmatpush1.bf16.msra.mxu0 0
        %1177 = vmatprep.subr.bf16.mxu0 0
        %1178 = vmatpush1.bf16.msra.mxu0 0
        %1179 = vmatprep.mubr.bf16.mxu0 %v1073
        %1180 = vmatmul.mubr.bf16.gmra.mrb[0].mxu0 %v1065
        %v1181 = vpop.f32.mrb[0].mxu0
        %v1182 = vadd.f32 0.0, %v1181
        %v1183 = vpop.f32.mrb[0].mxu0
        %v1184 = vadd.f32 0.0, %v1183
        %v1185 = vpop.f32.mrb[0].mxu0
        %v1186 = vadd.f32 0.0, %v1185
        %v1187 = vpop.f32.mrb[0].mxu0
        %v1188 = vadd.f32 0.0, %v1187
        %1189 = vmatprep.mubr.bf16.mxu0 %v1076
        %1190 = vmatmul.mubr.bf16.gmra.mrb[0].mxu0 %v1067
        %v1191 = vpop.f32.mrb[0].mxu0
        %v1192 = vadd.f32 0.0, %v1191
        %v1193 = vpop.f32.mrb[0].mxu0
        %v1194 = vadd.f32 0.0, %v1193
        %v1195 = vpop.f32.mrb[0].mxu0
        %v1196 = vadd.f32 0.0, %v1195
        %v1197 = vpop.f32.mrb[0].mxu0
        %v1198 = vadd.f32 0.0, %v1197
        %1199 = vdwg.mxu0
        %1200 = vmatprep.subr.bf16.mxu0 0
        %1201 = vmatpush1.bf16.msra.mxu0 %v983
        %1202 = vmatprep.subr.bf16.mxu0 0
        %1203 = vmatpush1.bf16.msra.mxu0 %v988
        %1204 = vmatprep.subr.bf16.mxu0 0
        %1205 = vmatpush1.bf16.msra.mxu0 %v993
        %1206 = vmatprep.subr.bf16.mxu0 0
        %1207 = vmatpush1.bf16.msra.mxu0 %v998
        %1208 = vmatprep.subr.bf16.mxu0 0
        %1209 = vmatpush1.bf16.msra.mxu0 %v1003
        %1210 = vmatprep.subr.bf16.mxu0 0
        %1211 = vmatpush1.bf16.msra.mxu0 %v1008
        %1212 = vmatprep.subr.bf16.mxu0 0
        %1213 = vmatpush1.bf16.msra.mxu0 %v1013
        %1214 = vmatprep.subr.bf16.mxu0 0
        %1215 = vmatpush1.bf16.msra.mxu0 %v1018
        %1216 = vmatprep.subr.bf16.mxu0 0
        %1217 = vmatpush1.bf16.msra.mxu0 %v1023
        %1218 = vmatprep.subr.bf16.mxu0 0
        %1219 = vmatpush1.bf16.msra.mxu0 %v1028
        %1220 = vmatprep.subr.bf16.mxu0 0
        %1221 = vmatpush1.bf16.msra.mxu0 %v1033
        %1222 = vmatprep.subr.bf16.mxu0 0
        %1223 = vmatpush1.bf16.msra.mxu0 %v1038
        %1224 = vmatprep.subr.bf16.mxu0 0
        %1225 = vmatpush1.bf16.msra.mxu0 %v1043
        %1226 = vmatprep.subr.bf16.mxu0 0
        %1227 = vmatpush1.bf16.msra.mxu0 %v1092
        %1228 = vmatprep.subr.bf16.mxu0 0
        %1229 = vmatpush1.bf16.msra.mxu0 0
        %1230 = vmatprep.subr.bf16.mxu0 0
        %1231 = vmatpush1.bf16.msra.mxu0 0
        %1232 = vmatprep.mubr.bf16.mxu0 %v1073
        %1233 = vmatmul.mubr.bf16.gmra.mrb[0].mxu0 %v1065
        %v1234 = vpop.f32.mrb[0].mxu0
        %v1235 = vadd.f32 0.0, %v1234
        %v1236 = vpop.f32.mrb[0].mxu0
        %v1237 = vpop.f32.mrb[0].mxu0
        %v1238 = vadd.f32 0.0, %v1237
        %v1239 = vpop.f32.mrb[0].mxu0
        %1240 = vmatprep.mubr.bf16.mxu0 %v1076
        %1241 = vmatmul.mubr.bf16.gmra.mrb[0].mxu0 %v1067
        %v1242 = vpop.f32.mrb[0].mxu0
        %v1243 = vadd.f32 0.0, %v1242
        %v1244 = vpop.f32.mrb[0].mxu0
        %v1245 = vpop.f32.mrb[0].mxu0
        %v1246 = vadd.f32 0.0, %v1245
        %v1247 = vpop.f32.mrb[0].mxu0
        %1248 = vdwg.mxu0
        %v1249 = vld [vmem:[%s211] sm:$0x1f]
        %v1251 = vlaneseq
        %v1252 = vshrl.u32 %v1251, 7
        %v1253 = vsub.s32 0, %v1252
        %v1254 = vrot.slane %v1249, %v1253
        %v1255 = vlaneseq
        %v1256 = vshrl.u32 %v1255, 7
        %v1257 = vsub.s32 1, %v1256
        %v1258 = vrot.slane %v1249, %v1257
        %v1259 = vlaneseq
        %v1260 = vshrl.u32 %v1259, 7
        %v1261 = vsub.s32 2, %v1260
        %v1262 = vrot.slane %v1249, %v1261
        %v1263 = vlaneseq
        %v1264 = vshrl.u32 %v1263, 7
        %v1265 = vsub.s32 3, %v1264
        %v1266 = vrot.slane %v1249, %v1265
        %v1267 = vlaneseq
        %v1268 = vshrl.u32 %v1267, 7
        %v1269 = vsub.s32 4, %v1268
        %v1270 = vrot.slane %v1249, %v1269
        %v1276 = vmul.f32 %v1129, %v1254
        %v1277 = vmul.f32 %v1131, %v1258
        %v1278 = vmul.f32 %v1182, %v1262
        %v1279 = vmul.f32 %v1184, %v1266
        %v1280 = vmul.f32 %v1235, %v1270
        %v1281 = vmul.f32 %v1133, %v1254
        %v1282 = vmul.f32 %v1135, %v1258
        %v1283 = vmul.f32 %v1186, %v1262
        %v1284 = vmul.f32 %v1188, %v1266
        %v1285 = vmul.f32 %v1238, %v1270
        %v1286 = vmul.f32 %v1139, %v1254
        %v1287 = vmul.f32 %v1141, %v1258
        %v1288 = vmul.f32 %v1192, %v1262
        %v1289 = vmul.f32 %v1194, %v1266
        %v1290 = vmul.f32 %v1243, %v1270
        %v1291 = vmul.f32 %v1143, %v1254
        %v1292 = vmul.f32 %v1145, %v1258
        %v1293 = vmul.f32 %v1196, %v1262
        %v1294 = vmul.f32 %v1198, %v1266
        %v1295 = vmul.f32 %v1246, %v1270
        %v1296 = vpack.c.bf16 %v1281, %v1276
        %v1297 = vpack.c.bf16 %v1282, %v1277
        %v1298 = vpack.c.bf16 %v1283, %v1278
        %v1299 = vpack.c.bf16 %v1284, %v1279
        %v1300 = vpack.c.bf16 %v1285, %v1280
        %v1301 = vpack.c.bf16 %v1291, %v1286
        %v1302 = vpack.c.bf16 %v1292, %v1287
        %v1303 = vpack.c.bf16 %v1293, %v1288
        %v1304 = vpack.c.bf16 %v1294, %v1289
        %v1305 = vpack.c.bf16 %v1295, %v1290
        %v1316 = vunpack.c.l.b16 %v1296
        %v1317 = vunpack.c.l.b16 %v1297
        %v1318 = vunpack.c.l.b16 %v1298
        %v1319 = vunpack.c.l.b16 %v1299
        %v1320 = vunpack.c.l.b16 %v1300
        %v1321 = vunpack.c.h.b16 %v1296
        %v1322 = vunpack.c.h.b16 %v1297
        %v1323 = vunpack.c.h.b16 %v1298
        %v1324 = vunpack.c.h.b16 %v1299
        %v1325 = vunpack.c.h.b16 %v1300
        %v1326 = vunpack.c.l.b16 %v1301
        %v1327 = vunpack.c.l.b16 %v1302
        %v1328 = vunpack.c.l.b16 %v1303
        %v1329 = vunpack.c.l.b16 %v1304
        %v1330 = vunpack.c.l.b16 %v1305
        %v1331 = vunpack.c.h.b16 %v1301
        %v1332 = vunpack.c.h.b16 %v1302
        %v1333 = vunpack.c.h.b16 %v1303
        %v1334 = vunpack.c.h.b16 %v1304
        %v1335 = vunpack.c.h.b16 %v1305
        %v1336 = vpack.c.b16 %v1317, %v1316
        %v1337 = vpack.c.b16 %v1319, %v1318
        %v1338 = vpack.c.b16 %v1320, %v1320
        %v1339 = vpack.c.b16 %v1322, %v1321
        %v1340 = vpack.c.b16 %v1324, %v1323
        %v1341 = vpack.c.b16 %v1325, %v1325
        %v1342 = vpack.c.b16 %v1327, %v1326
        %v1343 = vpack.c.b16 %v1329, %v1328
        %v1344 = vpack.c.b16 %v1330, %v1330
        %v1345 = vpack.c.b16 %v1332, %v1331
        %v1346 = vpack.c.b16 %v1334, %v1333
        %v1347 = vpack.c.b16 %v1335, %v1335
        %1360 = vst [vmem:[%s203] sm:$0xff] %v1336
        %1361 = vst [vmem:[%s203 + $0x8] sm:$0xff] %v1337
        %1362 = vst [vmem:[%s203 + $0x10] sm:$0xf] %v1338
        %1363 = vst [vmem:[%s203 + $0x14] sm:$0xff] %v1339
        %1364 = vst [vmem:[%s203 + $0x1c] sm:$0xff] %v1340
        %1365 = vst [vmem:[%s203 + $0x24] sm:$0xf] %v1341
        %1366 = vst [vmem:[%s203 + $0x28] sm:$0xff] %v1342
        %1367 = vst [vmem:[%s203 + $0x30] sm:$0xff] %v1343
        %1368 = vst [vmem:[%s203 + $0x38] sm:$0xf] %v1344
        %1369 = vst [vmem:[%s203 + $0x3c] sm:$0xff] %v1345
        %1370 = vst [vmem:[%s203 + $0x44] sm:$0xff] %v1346
        %1371 = vst [vmem:[%s203 + $0x4c] sm:$0xf] %v1347
        %p1372 = scmp.eq.s32.totalorder %s17, 0
        // Predicated region
        $region33: #{unet_innermost_forward.3} parent=31 // pred_check
          %p1373 = pneg %p1372
        $region34: #{unet_innermost_forward.3} parent=31 // pred_check_branch
          %1375 = sbr.rel (%p1373) target = $region36
        $region35: #{unet_innermost_forward.3} parent=31 // pred_region
          %vm1376 = vcmask 7168
          %1377 = vst.msk [vmem:[%s4] sm:$0xff] %vm1376, 0.0
          %1378 = vst.msk [vmem:[%s4 + $0x8] sm:$0xff] %vm1376, 0.0
          %1379 = vst.msk [vmem:[%s4 + $0x10] sm:$0xff] %vm1376, 0.0
          %1380 = vst.msk [vmem:[%s4 + $0x18] sm:$0xff] %vm1376, 0.0
          %1381 = vst.msk [vmem:[%s5] sm:$0xff] %vm1376, 0.0
          %1382 = vst.msk [vmem:[%s5 + $0x8] sm:$0xff] %vm1376, 0.0
          %1383 = vst.msk [vmem:[%s5 + $0x10] sm:$0xff] %vm1376, 0.0
          %1384 = vst.msk [vmem:[%s5 + $0x18] sm:$0xff] %vm1376, 0.0
        $region36: #{unet_innermost_forward.3} parent=31 // pred_fallthru
          _
        %v1385 = vunpack.c.l.bf16 %v1296
        %v1386 = vunpack.c.l.bf16 %v1297
        %v1387 = vunpack.c.l.bf16 %v1298
        %v1388 = vunpack.c.l.bf16 %v1299
        %v1389 = vunpack.c.l.bf16 %v1300
        %v1390 = vunpack.c.h.bf16 %v1296
        %v1391 = vunpack.c.h.bf16 %v1297
        %v1392 = vunpack.c.h.bf16 %v1298
        %v1393 = vunpack.c.h.bf16 %v1299
        %v1394 = vunpack.c.h.bf16 %v1300
        %v1395 = vunpack.c.l.bf16 %v1301
        %v1396 = vunpack.c.l.bf16 %v1302
        %v1397 = vunpack.c.l.bf16 %v1303
        %v1398 = vunpack.c.l.bf16 %v1304
        %v1399 = vunpack.c.l.bf16 %v1305
        %v1400 = vunpack.c.h.bf16 %v1301
        %v1401 = vunpack.c.h.bf16 %v1302
        %v1402 = vunpack.c.h.bf16 %v1303
        %v1403 = vunpack.c.h.bf16 %v1304
        %v1404 = vunpack.c.h.bf16 %v1305
        %v1405 = vld [vmem:[%s4] sm:$0xff]
        %v1406 = vld [vmem:[%s4 + $0x8] sm:$0xff]
        %v1407 = vld [vmem:[%s4 + $0x10] sm:$0xff]
        %v1408 = vld [vmem:[%s4 + $0x18] sm:$0xff]
        %v1409 = vadd.f32 %v1385, %v1386
        %v1410 = vadd.f32 %v1409, %v1387
        %v1411 = vadd.f32 %v1410, %v1388
        %v1412 = vadd.f32 %v1411, %v1389
        %1413 = vadd.xlane.f32.xlu0 %v1412
        %v1414 = vpop.xlane.xlu0 %1413
        %v1415 = vadd.f32 %v1390, %v1391
        %v1416 = vadd.f32 %v1415, %v1392
        %v1417 = vadd.f32 %v1416, %v1393
        %v1418 = vadd.f32 %v1417, %v1394
        %1419 = vadd.xlane.f32.xlu0 %v1418
        %v1420 = vpop.xlane.xlu0 %1419
        %v1421 = vadd.f32 %v1395, %v1396
        %v1422 = vadd.f32 %v1421, %v1397
        %v1423 = vadd.f32 %v1422, %v1398
        %v1424 = vadd.f32 %v1423, %v1399
        %1425 = vadd.xlane.f32.xlu0 %v1424
        %v1426 = vpop.xlane.xlu0 %1425
        %v1427 = vadd.f32 %v1400, %v1401
        %v1428 = vadd.f32 %v1427, %v1402
        %v1429 = vadd.f32 %v1428, %v1403
        %v1430 = vadd.f32 %v1429, %v1404
        %1431 = vadd.xlane.f32.xlu0 %v1430
        %v1432 = vpop.xlane.xlu0 %1431
        %v1433 = vadd.f32 %v1405, %v1414
        %v1434 = vadd.f32 %v1406, %v1420
        %v1435 = vadd.f32 %v1407, %v1426
        %v1436 = vadd.f32 %v1408, %v1432
        %vm1437 = vcmask 7168
        %1438 = vst.msk [vmem:[%s4] sm:$0xff] %vm1437, %v1433
        %1439 = vst.msk [vmem:[%s4 + $0x8] sm:$0xff] %vm1437, %v1434
        %1440 = vst.msk [vmem:[%s4 + $0x10] sm:$0xff] %vm1437, %v1435
        %1441 = vst.msk [vmem:[%s4 + $0x18] sm:$0xff] %vm1437, %v1436
        %v1442 = vld [vmem:[%s5] sm:$0xff]
        %v1443 = vld [vmem:[%s5 + $0x8] sm:$0xff]
        %v1444 = vld [vmem:[%s5 + $0x10] sm:$0xff]
        %v1445 = vld [vmem:[%s5 + $0x18] sm:$0xff]
        %v1446 = vmul.f32 %v1385, %v1385
        %v1447 = vmul.f32 %v1386, %v1386
        %v1448 = vmul.f32 %v1387, %v1387
        %v1449 = vmul.f32 %v1388, %v1388
        %v1450 = vmul.f32 %v1389, %v1389
        %v1451 = vmul.f32 %v1390, %v1390
        %v1452 = vmul.f32 %v1391, %v1391
        %v1453 = vmul.f32 %v1392, %v1392
        %v1454 = vmul.f32 %v1393, %v1393
        %v1455 = vmul.f32 %v1394, %v1394
        %v1456 = vmul.f32 %v1395, %v1395
        %v1457 = vmul.f32 %v1396, %v1396
        %v1458 = vmul.f32 %v1397, %v1397
        %v1459 = vmul.f32 %v1398, %v1398
        %v1460 = vmul.f32 %v1399, %v1399
        %v1461 = vmul.f32 %v1400, %v1400
        %v1462 = vmul.f32 %v1401, %v1401
        %v1463 = vmul.f32 %v1402, %v1402
        %v1464 = vmul.f32 %v1403, %v1403
        %v1465 = vmul.f32 %v1404, %v1404
        %v1466 = vadd.f32 %v1446, %v1447
        %v1467 = vadd.f32 %v1466, %v1448
        %v1468 = vadd.f32 %v1467, %v1449
        %v1469 = vadd.f32 %v1468, %v1450
        %1470 = vadd.xlane.f32.xlu0 %v1469
        %v1471 = vpop.xlane.xlu0 %1470
        %v1472 = vadd.f32 %v1451, %v1452
        %v1473 = vadd.f32 %v1472, %v1453
        %v1474 = vadd.f32 %v1473, %v1454
        %v1475 = vadd.f32 %v1474, %v1455
        %1476 = vadd.xlane.f32.xlu0 %v1475
        %v1477 = vpop.xlane.xlu0 %1476
        %v1478 = vadd.f32 %v1456, %v1457
        %v1479 = vadd.f32 %v1478, %v1458
        %v1480 = vadd.f32 %v1479, %v1459
        %v1481 = vadd.f32 %v1480, %v1460
        %1482 = vadd.xlane.f32.xlu0 %v1481
        %v1483 = vpop.xlane.xlu0 %1482
        %v1484 = vadd.f32 %v1461, %v1462
        %v1485 = vadd.f32 %v1484, %v1463
        %v1486 = vadd.f32 %v1485, %v1464
        %v1487 = vadd.f32 %v1486, %v1465
        %1488 = vadd.xlane.f32.xlu0 %v1487
        %v1489 = vpop.xlane.xlu0 %1488
        %v1490 = vadd.f32 %v1442, %v1471
        %v1491 = vadd.f32 %v1443, %v1477
        %v1492 = vadd.f32 %v1444, %v1483
        %v1493 = vadd.f32 %v1445, %v1489
        %1494 = vst.msk [vmem:[%s5] sm:$0xff] %vm1437, %v1490
        %1495 = vst.msk [vmem:[%s5 + $0x8] sm:$0xff] %vm1437, %v1491
        %1496 = vst.msk [vmem:[%s5 + $0x10] sm:$0xff] %vm1437, %v1492
        %1497 = vst.msk [vmem:[%s5 + $0x18] sm:$0xff] %vm1437, %v1493
        %s1498 = sand.u32 %s93, 1
        %s1499 = sand.u32 %s93, 1
        %s1500 = smul.addr %s1499, 80
        %s1501 = scalar_lea.vmem [#allocation2], %s1500
        // Predicated region
        $region37: #{unet_innermost_forward.3} parent=31 // pred_check
          %p1502 = pneg %p103
        $region38: #{unet_innermost_forward.3} parent=31 // pred_check_branch
          %1504 = sbr.rel (%p1502) target = $region40
        $region39: #{unet_innermost_forward.3} parent=31 // pred_region
          %s1505 = smul.u32 5, %s17
          %s1506 = smul.addr %s1505, 4
          %s1507 = scalar_lea.vmem %s3, %s1506
          // Predicated region
          $region41: #{unet_innermost_forward.3} parent=39 // pred_check
            _
          $region42: #{unet_innermost_forward.3} parent=39 // pred_check_branch
            %1509 = sbr.rel (0) target = $region44
          $region43: #{unet_innermost_forward.3} parent=39 // pred_region
            // Predicated region
            $region45: #{unet_innermost_forward.3} parent=43 // pred_check
              _
            $region46: #{unet_innermost_forward.3} parent=43 // pred_check_branch
              %1511 = sbr.rel (0) target = $region48
            $region47: #{unet_innermost_forward.3} parent=43 // pred_region
              %s1512 = scalar_lea.vmem %s1501, 16 [#allocation2]
              %s1513 = scalar_lea.vmem %s1507, 16
              loop: start=0, step=1, limit=1
              $region49: #{unet_innermost_forward.3} parent=47 // loop_pre_header
                _
              $region50: #{unet_innermost_forward.3} parent=47 // loop_header
                %s1515 = sphi 0, %s1519
                %p1516 = scmp.ge.s32.totalorder %s1515, 1
                %s1520 = sphi %s1501, %s1501
                %s1521 = sphi %s1507, %s1507
              $region51: #{unet_innermost_forward.3} parent=47 // loop_header_branch
                %1518 = sbr.rel (%p1516) target = $region55
              $region52: #{unet_innermost_forward.3} parent=47 // loop_body
                %v1522 = vld [vmem:[%s1520] sm:$0xff]
                %1523 = vst [vmem:[%s1521] sm:$0xff] %v1522
                %v1524 = vld [vmem:[%s1520 + $0x8] sm:$0xff]
                %1525 = vst [vmem:[%s1521 + $0x8] sm:$0xff] %v1524
                %v1526 = vld [vmem:[%s1520 + $0x14] sm:$0xff]
                %1527 = vst [vmem:[%s1521 + $0x28] sm:$0xff] %v1526
                %v1528 = vld [vmem:[%s1520 + $0x1c] sm:$0xff]
                %1529 = vst [vmem:[%s1521 + $0x30] sm:$0xff] %v1528
                %v1530 = vld [vmem:[%s1520 + $0x28] sm:$0xff]
                %1531 = vst [vmem:[%s1521 + $0x50] sm:$0xff] %v1530
                %v1532 = vld [vmem:[%s1520 + $0x30] sm:$0xff]
                %1533 = vst [vmem:[%s1521 + $0x58] sm:$0xff] %v1532
                %v1534 = vld [vmem:[%s1520 + $0x3c] sm:$0xff]
                %1535 = vst [vmem:[%s1521 + $0x78] sm:$0xff] %v1534
                %v1536 = vld [vmem:[%s1520 + $0x44] sm:$0xff]
                %1537 = vst [vmem:[%s1521 + $0x80] sm:$0xff] %v1536
              $region53: #{unet_innermost_forward.3} parent=47 // loop_footer
                %s1519 = sadd.s32 1, %s1515
              $region54: #{unet_innermost_forward.3} parent=47 // loop_footer_branch
                %1514 = sbr.rel target = $region50
              $region55: #{unet_innermost_forward.3} parent=47 // loop_exit
                _
              loop: start=0, step=1, limit=1
              $region56: #{unet_innermost_forward.3} parent=47 // loop_pre_header
                _
              $region57: #{unet_innermost_forward.3} parent=47 // loop_header
                %s1540 = sphi 0, %s1544
                %p1541 = scmp.ge.s32.totalorder %s1540, 1
                %s1545 = sphi %s1512, %s1512
                %s1546 = sphi %s1513, %s1513
              $region58: #{unet_innermost_forward.3} parent=47 // loop_header_branch
                %1543 = sbr.rel (%p1541) target = $region62
              $region59: #{unet_innermost_forward.3} parent=47 // loop_body
                %v1547 = vld [vmem:[%s1545] sm:$0xf]
                %1548 = vst [vmem:[%s1546] sm:$0xf] %v1547
                %v1549 = vld [vmem:[%s1545 + $0x14] sm:$0xf]
                %1550 = vst [vmem:[%s1546 + $0x28] sm:$0xf] %v1549
                %v1551 = vld [vmem:[%s1545 + $0x28] sm:$0xf]
                %1552 = vst [vmem:[%s1546 + $0x50] sm:$0xf] %v1551
                %v1553 = vld [vmem:[%s1545 + $0x3c] sm:$0xf]
                %1554 = vst [vmem:[%s1546 + $0x78] sm:$0xf] %v1553
              $region60: #{unet_innermost_forward.3} parent=47 // loop_footer
                %s1544 = sadd.s32 1, %s1540
              $region61: #{unet_innermost_forward.3} parent=47 // loop_footer_branch
                %1539 = sbr.rel target = $region57
              $region62: #{unet_innermost_forward.3} parent=47 // loop_exit
                _
            $region48: #{unet_innermost_forward.3} parent=43 // pred_fallthru
              _
          $region44: #{unet_innermost_forward.3} parent=39 // pred_fallthru
            _
          %1555 = vnop
        $region40: #{unet_innermost_forward.3} parent=31 // pred_fallthru
          _
        // Predicated region
        $region63: #{unet_innermost_forward.3} parent=31 // pred_check
          %p1556 = pneg %p124
        $region64: #{unet_innermost_forward.3} parent=31 // pred_check_branch
          %1558 = sbr.rel (%p1556) target = $region66
        $region65: #{unet_innermost_forward.3} parent=31 // pred_region
          _
        $region66: #{unet_innermost_forward.3} parent=31 // pred_fallthru
          _
        // Predicated region
        $region67: #{unet_innermost_forward.3} parent=31 // pred_check
          %p1559 = pneg %p145
        $region68: #{unet_innermost_forward.3} parent=31 // pred_check_branch
          %1561 = sbr.rel (%p1559) target = $region70
        $region69: #{unet_innermost_forward.3} parent=31 // pred_region
          _
        $region70: #{unet_innermost_forward.3} parent=31 // pred_fallthru
          _
        // Predicated region
        $region71: #{unet_innermost_forward.3} parent=31 // pred_check
          %p1562 = pneg %p124
        $region72: #{unet_innermost_forward.3} parent=31 // pred_check_branch
          %1564 = sbr.rel (%p1562) target = $region74
        $region73: #{unet_innermost_forward.3} parent=31 // pred_region
          _
        $region74: #{unet_innermost_forward.3} parent=31 // pred_fallthru
          _
        // Predicated region
        $region75: #{unet_innermost_forward.3} parent=31 // pred_check
          %p1565 = pneg %p145
        $region76: #{unet_innermost_forward.3} parent=31 // pred_check_branch
          %1567 = sbr.rel (%p1565) target = $region78
        $region77: #{unet_innermost_forward.3} parent=31 // pred_region
          _
        $region78: #{unet_innermost_forward.3} parent=31 // pred_fallthru
          _
      $region32: #{unet_innermost_forward.3} parent=5 // pred_fallthru
        _
      %p1568 = scmp.le.s32.totalorder 2, %s12
      // Predicated region
      $region79: #{unet_innermost_forward.3} parent=5 // pred_check
        %p1569 = pneg %p1568
      $region80: #{unet_innermost_forward.3} parent=5 // pred_check_branch
        %1571 = sbr.rel (%p1569) target = $region82
      $region81: #{unet_innermost_forward.3} parent=5 // pred_region
        %s1572 = ssub.s32 %s12, 2
        // Predicated region
        $region83: #{unet_innermost_forward.3} parent=81 // pred_check
          %p1573 = pneg %p109
        $region84: #{unet_innermost_forward.3} parent=81 // pred_check_branch
          %1575 = sbr.rel (%p1573) target = $region86
        $region85: #{unet_innermost_forward.3} parent=81 // pred_region
          %s1576 = sand.u32 %s94, 1
          %s1577 = sand.u32 %s94, 1
          %s1578 = smul.addr %s1577, 80
          %s1579 = scalar_lea.vmem [#allocation2], %s1578
        $region86: #{unet_innermost_forward.3} parent=81 // pred_fallthru
          _
      $region82: #{unet_innermost_forward.3} parent=5 // pred_fallthru
        _
    $region6: #{unet_innermost_forward.3} parent=1 // loop_footer
      %s16 = sadd.s32 1, %s12
    $region7: #{unet_innermost_forward.3} parent=1 // loop_footer_branch
      %11 = sbr.rel target = $region3
    $region8: #{unet_innermost_forward.3} parent=1 // loop_exit
      _

</llo_original>
